<compile_context>
chip_gen: v6e
topology: v6e:2x2x1
jax: 0.10.0
libtpu: 0.0.40
codegen_flags: <defaults>
</compile_context>

<pallas_src>
import numpy as np
import jax
import jax.numpy as jnp
from jax import lax
from jax.experimental import pallas as pl
from jax.experimental.pallas import tpu as pltpu


def _mixconv_kernel(xt_ref, w_ref, scale_ref, bias_ref, o_ref):
    # xt_ref   : (1, 1, th+2, W+2, C1)  halo'd row tile (compute dtype)
    # w_ref    : (9*C1, C2)             combined im2col weights (compute dtype)
    # scale_ref: (1, C2)  bias_ref: (1, C2)   folded BatchNorm (f32)
    # o_ref    : (1, 1, th*W, C2)
    xp = xt_ref[0, 0]                               # (th+2, W+2, C1)
    thp2, wp2, c1 = xp.shape
    th, w = thp2 - 2, wp2 - 2
    rows = th * w

    # im2col in VMEM: tap t = dy*3 + dx lands in lanes [t*C1, (t+1)*C1).
    taps = [xp[dy:dy + th, dx:dx + w, :].reshape(rows, c1)
            for dy in range(3) for dx in range(3)]
    xcat = jnp.concatenate(taps, axis=-1)           # (rows, 9*C1)

    # Single matmul covers both conv groups (1x1 group weights are zero off
    # the center tap).  f32 accumulation on the MXU.
    acc = jnp.dot(xcat, w_ref[...], preferred_element_type=jnp.float32)

    z = acc * scale_ref[...] + bias_ref[...]        # folded BatchNorm (eval)
    z = jnp.where(z > 0, z, 0.1 * z)                # LeakyReLU(0.1)
    res = taps[4].astype(jnp.float32)               # residual: center tap (c1 == c2)
    o_ref[0, 0] = (res + z).astype(o_ref.dtype)


def mixconv2d_forward(x_nchw, w1_oihw, w3_oihw, gamma, beta, rmean, rvar,
                      eps=1e-5, compute_dtype=jnp.float32,
                      vmem_budget_bytes=8 * 1024 * 1024):
    N, C1, H, W = x_nchw.shape
    C2a = w1_oihw.shape[0]
    C2b = w3_oihw.shape[0]
    C2 = C2a + C2b
    assert C1 == C2, "residual `x + act(bn(cat(...)))` requires c1 == c2"

    # ---- pick the largest row-tile height (divisor of H) fitting the budget --
    itemsize = jnp.dtype(compute_dtype).itemsize

    def tile_bytes(t):
        inp = (t + 2) * (W + 2) * C1 * itemsize
        out = t * W * C2 * 4
        return 2 * (inp + out)                      # double-buffered in + out

    th = 1
    for cand in range(H, 0, -1):
        if H % cand == 0 and tile_bytes(cand) <= vmem_budget_bytes:
            th = cand
            break
    nt = H // th

    # ---- glue: NCHW -> NHWC, zero-pad, halo'd row tiles (no 9x tap slab) -----
    x_nhwc = jnp.transpose(x_nchw, (0, 2, 3, 1)).astype(compute_dtype)
    xp = jnp.pad(x_nhwc, ((0, 0), (1, 1), (1, 1), (0, 0)))
    if nt == 1:
        xt = xp[:, None]                                          # (N,1,H+2,W+2,C1)
    else:
        xt = jnp.stack([xp[:, j * th:j * th + th + 2] for j in range(nt)],
                       axis=1)                                    # (N,nt,th+2,W+2,C1)

    # ---- combined im2col weights: rows ordered (tap, cin), cols [1x1 | 3x3] --
    w3 = jnp.stack([jnp.transpose(w3_oihw[:, :, dy, dx])
                    for dy in range(3) for dx in range(3)], axis=0)   # (9, C1, C2b)
    w1_full = jnp.zeros((9, C1, C2a), w1_oihw.dtype).at[4].set(
        jnp.transpose(w1_oihw[:, :, 0, 0]))                           # (9, C1, C2a)
    w_all = jnp.concatenate([w1_full, w3], axis=-1).reshape(9 * C1, C2)
    w_all = w_all.astype(compute_dtype)

    # ---- folded BatchNorm (eval mode), kept in f32 ---------------------------
    inv_std = 1.0 / jnp.sqrt(rvar + eps)
    scale = (gamma * inv_std).reshape(1, C2).astype(jnp.float32)
    bias = (beta - rmean * gamma * inv_std).reshape(1, C2).astype(jnp.float32)

    out = pl.pallas_call(
        _mixconv_kernel,
        out_shape=jax.ShapeDtypeStruct((N, nt, th * W, C2), x_nchw.dtype),
        grid_spec=pltpu.PrefetchScalarGridSpec(
            num_scalar_prefetch=0,
            grid=(N, nt),
            in_specs=[
                pl.BlockSpec((1, 1, th + 2, W + 2, C1),
                             lambda n, j: (n, j, 0, 0, 0)),
                pl.BlockSpec((9 * C1, C2), lambda n, j: (0, 0)),
                pl.BlockSpec((1, C2), lambda n, j: (0, 0)),
                pl.BlockSpec((1, C2), lambda n, j: (0, 0)),
            ],
            out_specs=pl.BlockSpec((1, 1, th * W, C2),
                                   lambda n, j: (n, j, 0, 0)),
        ),
        compiler_params=pltpu.CompilerParams(
            dimension_semantics=("parallel", "parallel"),
            vmem_limit_bytes=32 * 1024 * 1024),
    )(xt, w_all, scale, bias)

    out_nhwc = out.reshape(N, H, W, C2)
    return jnp.transpose(out_nhwc, (0, 3, 1, 2))                  # back to NCHW


def mixconv2d_reference(x, w1_oihw, w3_oihw, gamma, beta, rmean, rvar, eps=1e-5):
    dn = ("NCHW", "OIHW", "NCHW")
    o1 = lax.conv_general_dilated(x, w1_oihw, (1, 1), [(0, 0), (0, 0)],
                                  dimension_numbers=dn)
    o3 = lax.conv_general_dilated(x, w3_oihw, (1, 1), [(1, 1), (1, 1)],
                                  dimension_numbers=dn)
    z = jnp.concatenate([o1, o3], axis=1)
    bc = lambda v: v[None, :, None, None]
    zbn = (z - bc(rmean)) / jnp.sqrt(bc(rvar) + eps) * bc(gamma) + bc(beta)
    act = jnp.where(zbn > 0, zbn, 0.1 * zbn)
    return x + act


if __name__ == "__main__":
    c1 = c2 = 4
    k = (1, 3)
    N, H, W = 2, 16, 16

    # channel split (equal_ch=True branch of MixConv2d.__init__)
    groups = len(k)
    idx = np.floor(np.linspace(0, groups - 1e-6, c2))
    c_ = [int((idx == g).sum()) for g in range(groups)]   # -> [2, 2]

    key = jax.random.PRNGKey(0)
    k0, k1, k2, k3, k4, k5, k6 = jax.random.split(key, 7)
    x = jax.random.normal(k0, (N, c1, H, W), jnp.float32)
    w1 = jax.random.normal(k1, (c_[0], c1, k[0], k[0]), jnp.float32) * 0.3
    w3 = jax.random.normal(k2, (c_[1], c1, k[1], k[1]), jnp.float32) * 0.1
    gamma = 1.0 + 0.1 * jax.random.normal(k3, (c2,), jnp.float32)
    beta = 0.1 * jax.random.normal(k4, (c2,), jnp.float32)
    rmean = 0.1 * jax.random.normal(k5, (c2,), jnp.float32)
    rvar = jax.random.uniform(k6, (c2,), jnp.float32, minval=0.5, maxval=1.5)
    # TODO(synk): BatchNorm is applied in inference mode (running stats folded
    # into scale/bias); PyTorch's default training-mode batch statistics are
    # not computed here.

    ref = mixconv2d_reference(x, w1, w3, gamma, beta, rmean, rvar)

    # f32 path: strict correctness check.
    out_f32 = jax.block_until_ready(
        mixconv2d_forward(x, w1, w3, gamma, beta, rmean, rvar,
                          compute_dtype=jnp.float32))
    np.testing.assert_allclose(np.asarray(out_f32), np.asarray(ref),
                               rtol=1e-4, atol=1e-4)

    # bf16 matmul-operand path (halved HBM stream, bf16 MXU); f32 epilogue.
    out_bf16 = jax.block_until_ready(
        mixconv2d_forward(x, w1, w3, gamma, beta, rmean, rvar,
                          compute_dtype=jnp.bfloat16))
    np.testing.assert_allclose(np.asarray(out_bf16), np.asarray(ref),
                               rtol=5e-2, atol=1e-1)

    print("KERNEL_OK")
</pallas_src>

<mosaic_0001>
module attributes {stable_mosaic.version = 11 : i64} {
  func.func @_mixconv_kernel(%arg0: i32, %arg1: i32, %arg2: memref<1x1x18x18x4xf32, #tpu.memory_space<vmem>>, %arg3: memref<36x4xf32, #tpu.memory_space<vmem>>, %arg4: memref<1x4xf32, #tpu.memory_space<vmem>>, %arg5: memref<1x4xf32, #tpu.memory_space<vmem>>, %arg6: memref<1x1x256x4xf32, #tpu.memory_space<vmem>>) attributes {dimension_semantics = [#tpu.dimension_semantics<parallel>, #tpu.dimension_semantics<parallel>], iteration_bounds = array<i64: 2, 1>, scalar_prefetch = 0 : i64, scratch_operands = 0 : i64, tpu.core_type = #tpu.core_type<tc>, window_params = [{transform_indices = @transform_0, window_bounds = array<i64: 1, 1, 18, 18, 4>}, {pipeline_mode = #tpu.pipeline_mode<synchronous>, transform_indices = @transform_1, window_bounds = array<i64: 36, 4>}, {pipeline_mode = #tpu.pipeline_mode<synchronous>, transform_indices = @transform_2, window_bounds = array<i64: 1, 4>}, {pipeline_mode = #tpu.pipeline_mode<synchronous>, transform_indices = @transform_3, window_bounds = array<i64: 1, 4>}, {transform_indices = @transform_4, window_bounds = array<i64: 1, 1, 256, 4>}]} {
    %c0 = arith.constant 0 : index
    %c0_0 = arith.constant 0 : index
    %c0_1 = arith.constant 0 : index
    %c0_2 = arith.constant 0 : index
    %c0_3 = arith.constant 0 : index
    %0 = vector.load %arg2[%c0, %c0_0, %c0_1, %c0_2, %c0_3] : memref<1x1x18x18x4xf32, #tpu.memory_space<vmem>>, vector<1x1x18x18x4xf32>
    %1 = vector.shape_cast %0 : vector<1x1x18x18x4xf32> to vector<18x18x4xf32>
    %2 = vector.extract_strided_slice %1 {offsets = [0, 0, 0], sizes = [16, 16, 4], strides = [1, 1, 1]} : vector<18x18x4xf32> to vector<16x16x4xf32>
    %3 = vector.shape_cast %2 : vector<16x16x4xf32> to vector<256x4xf32>
    %4 = vector.extract_strided_slice %1 {offsets = [0, 1, 0], sizes = [16, 16, 4], strides = [1, 1, 1]} : vector<18x18x4xf32> to vector<16x16x4xf32>
    %5 = vector.shape_cast %4 : vector<16x16x4xf32> to vector<256x4xf32>
    %6 = vector.extract_strided_slice %1 {offsets = [0, 2, 0], sizes = [16, 16, 4], strides = [1, 1, 1]} : vector<18x18x4xf32> to vector<16x16x4xf32>
    %7 = vector.shape_cast %6 : vector<16x16x4xf32> to vector<256x4xf32>
    %8 = vector.extract_strided_slice %1 {offsets = [1, 0, 0], sizes = [16, 16, 4], strides = [1, 1, 1]} : vector<18x18x4xf32> to vector<16x16x4xf32>
    %9 = vector.shape_cast %8 : vector<16x16x4xf32> to vector<256x4xf32>
    %10 = vector.extract_strided_slice %1 {offsets = [1, 1, 0], sizes = [16, 16, 4], strides = [1, 1, 1]} : vector<18x18x4xf32> to vector<16x16x4xf32>
    %11 = vector.shape_cast %10 : vector<16x16x4xf32> to vector<256x4xf32>
    %12 = vector.extract_strided_slice %1 {offsets = [1, 2, 0], sizes = [16, 16, 4], strides = [1, 1, 1]} : vector<18x18x4xf32> to vector<16x16x4xf32>
    %13 = vector.shape_cast %12 : vector<16x16x4xf32> to vector<256x4xf32>
    %14 = vector.extract_strided_slice %1 {offsets = [2, 0, 0], sizes = [16, 16, 4], strides = [1, 1, 1]} : vector<18x18x4xf32> to vector<16x16x4xf32>
    %15 = vector.shape_cast %14 : vector<16x16x4xf32> to vector<256x4xf32>
    %16 = vector.extract_strided_slice %1 {offsets = [2, 1, 0], sizes = [16, 16, 4], strides = [1, 1, 1]} : vector<18x18x4xf32> to vector<16x16x4xf32>
    %17 = vector.shape_cast %16 : vector<16x16x4xf32> to vector<256x4xf32>
    %18 = vector.extract_strided_slice %1 {offsets = [2, 2, 0], sizes = [16, 16, 4], strides = [1, 1, 1]} : vector<18x18x4xf32> to vector<16x16x4xf32>
    %19 = vector.shape_cast %18 : vector<16x16x4xf32> to vector<256x4xf32>
    %20 = tpu.concatenate %3, %5, %7, %9, %11, %13, %15, %17, %19 in 1 : vector<256x4xf32>, vector<256x4xf32>, vector<256x4xf32>, vector<256x4xf32>, vector<256x4xf32>, vector<256x4xf32>, vector<256x4xf32>, vector<256x4xf32>, vector<256x4xf32> -> vector<256x36xf32>
    %c0_4 = arith.constant 0 : index
    %c0_5 = arith.constant 0 : index
    %21 = vector.load %arg3[%c0_4, %c0_5] : memref<36x4xf32, #tpu.memory_space<vmem>>, vector<36x4xf32>
    %cst = arith.constant dense<0.000000e+00> : vector<256x4xf32>
    %22 = tpu.matmul %20, %21, %cst {dimension_numbers = #tpu.dot_dimension_numbers<[1], [0], [0], [1], [0, 0, 1, 1], [], []>} : vector<256x36xf32>, vector<36x4xf32>, vector<256x4xf32> -> vector<256x4xf32>
    %c0_6 = arith.constant 0 : index
    %c0_7 = arith.constant 0 : index
    %23 = vector.load %arg4[%c0_6, %c0_7] : memref<1x4xf32, #tpu.memory_space<vmem>>, vector<1x4xf32>
    %24 = vector.broadcast %23 : vector<1x4xf32> to vector<256x4xf32>
    %25 = arith.mulf %22, %24 : vector<256x4xf32>
    %c0_8 = arith.constant 0 : index
    %c0_9 = arith.constant 0 : index
    %26 = vector.load %arg5[%c0_8, %c0_9] : memref<1x4xf32, #tpu.memory_space<vmem>>, vector<1x4xf32>
    %27 = vector.broadcast %26 : vector<1x4xf32> to vector<256x4xf32>
    %28 = arith.addf %25, %27 : vector<256x4xf32>
    %cst_10 = arith.constant 0.000000e+00 : f32
    %29 = vector.broadcast %cst_10 : f32 to vector<256x4xf32>
    %30 = arith.cmpf ogt, %28, %29 : vector<256x4xf32>
    %cst_11 = arith.constant 1.000000e-01 : f32
    %31 = vector.broadcast %cst_11 : f32 to vector<256x4xf32>
    %32 = arith.mulf %31, %28 : vector<256x4xf32>
    %33 = arith.select %30, %28, %32 : vector<256x4xi1>, vector<256x4xf32>
    %34 = arith.addf %11, %33 : vector<256x4xf32>
    %c0_12 = arith.constant 0 : index
    %c0_13 = arith.constant 0 : index
    %c0_14 = arith.constant 0 : index
    %c0_15 = arith.constant 0 : index
    %35 = vector.load %arg6[%c0_12, %c0_13, %c0_14, %c0_15] : memref<1x1x256x4xf32, #tpu.memory_space<vmem>>, vector<1x1x256x4xf32>
    %36 = vector.shape_cast %35 : vector<1x1x256x4xf32> to vector<256x4xf32>
    %37 = vector.shape_cast %34 : vector<256x4xf32> to vector<1x1x256x4xf32>
    tpu.vector_store %arg6[%c0_12, %c0_13, %c0_14, %c0_15], %37 {strides = array<i32>} : memref<1x1x256x4xf32, #tpu.memory_space<vmem>>, vector<1x1x256x4xf32>,
    return
  }
  func.func @transform_0(%arg0: i32, %arg1: i32) -> (i32, i32, i32, i32, i32) {
    %c0_i32 = arith.constant 0 : i32
    %c0_i32_0 = arith.constant 0 : i32
    %c0_i32_1 = arith.constant 0 : i32
    %c0_i32_2 = arith.constant 0 : i32
    return %arg0, %arg1, %c0_i32, %c0_i32_0, %c0_i32_1 : i32, i32, i32, i32, i32
  }
  func.func @transform_1(%arg0: i32, %arg1: i32) -> (i32, i32) {
    %c0_i32 = arith.constant 0 : i32
    %c0_i32_0 = arith.constant 0 : i32
    %c0_i32_1 = arith.constant 0 : i32
    return %c0_i32, %c0_i32_0 : i32, i32
  }
  func.func @transform_2(%arg0: i32, %arg1: i32) -> (i32, i32) {
    %c0_i32 = arith.constant 0 : i32
    %c0_i32_0 = arith.constant 0 : i32
    %c0_i32_1 = arith.constant 0 : i32
    return %c0_i32, %c0_i32_0 : i32, i32
  }
  func.func @transform_3(%arg0: i32, %arg1: i32) -> (i32, i32) {
    %c0_i32 = arith.constant 0 : i32
    %c0_i32_0 = arith.constant 0 : i32
    %c0_i32_1 = arith.constant 0 : i32
    return %c0_i32, %c0_i32_0 : i32, i32
  }
  func.func @transform_4(%arg0: i32, %arg1: i32) -> (i32, i32, i32, i32) {
    %c0_i32 = arith.constant 0 : i32
    %c0_i32_0 = arith.constant 0 : i32
    %c0_i32_1 = arith.constant 0 : i32
    return %arg0, %arg1, %c0_i32, %c0_i32_0 : i32, i32, i32, i32
  }
}

</mosaic_0001>

<llo_original>
// kernel: tpu_custom_call.1
$region0: #{tpu_custom_call.1}
  #allocation0 [shape = 'u32[]', space=smem, size = 0x4, offset = 0x4, fixed_abs, tag = 'smem constant byte address 0x4 - core index']
  #allocation1 [shape = 'u32[144,128]{1,0:T(1,128)}', space=vmem, size = 0x12000, scoped, tag = 'internal scratch']
  %s0 = inlined_call_operand.vmem [shape: f32[2,1,18,18,4], index: 0, kind: input, shape index: {}]
  %s1 = inlined_call_operand.vmem [shape: f32[36,4], index: 1, kind: input, shape index: {}]
  %s2 = inlined_call_operand.vmem [shape: f32[1,4], index: 2, kind: input, shape index: {}]
  %s3 = inlined_call_operand.vmem [shape: f32[1,4], index: 3, kind: input, shape index: {}]
  %s4 = inlined_call_operand.vmem [shape: f32[2,1,256,4], index: 4, kind: output, shape index: {}]
  %s5 = sld [smem:[#allocation0]]
  $region49: #{tpu_custom_call.1} parent=0
    _
  %s7 = ssub.s32 1, %s5
  %s8 = scalar_select 0, %s7, %s5
  loop: start=0, step=1, limit=4
  $region2: #{tpu_custom_call.1} parent=0 // loop_pre_header
    _
  $region3: #{tpu_custom_call.1} parent=0 // loop_header
    %s10 = sphi 0, %s14
    %p11 = scmp.ge.s32.totalorder %s10, 4
    %s17 = sphi 0, %s29
    %s18 = sphi 0, %s25
    %s19 = sphi 0, %s17
    %s20 = sphi 0, %s18
    %s21 = sphi 0, %s19
    %s22 = sphi 0, %s20
    %s34 = sphi 0, %s36
    %s37 = sphi 0, %s34
    %s38 = sphi 0, %s37
    %s54 = sphi 0, %s38
    %s58 = sphi 0, %s58
    %s60 = sphi 0, %s58
    %s61 = sphi 0, %s60
    %s75 = sphi 0, %s61
    %s79 = sphi 0, %s79
    %s81 = sphi 0, %s79
    %s82 = sphi 0, %s81
    %s96 = sphi 0, %s82
    %s100 = sphi 0, %s100
    %s102 = sphi 0, %s100
    %s103 = sphi 0, %s102
    %s117 = sphi 0, %s103
    %s125 = sphi 0, %s127
    %s128 = sphi 0, %s125
    %s129 = sphi 0, %s128
    %s145 = sphi 0, %s129
  $region4: #{tpu_custom_call.1} parent=0 // loop_header_branch
    %13 = sbr.rel (%p11) target = $region8
  $region5: #{tpu_custom_call.1} parent=0 // loop_body
    %s15 = ssub.s32 %s10, 1
    %s16 = ssub.s32 %s10, 2
    %s23 = sadd.s32 1, %s18
    %p24 = scmp.ge.s32.totalorder %s23, 1
    %s25 = scalar_select %p24, 0, %s23
    %s26 = sadd.s32 1, %s17
    %s27 = scalar_select %p24, %s26, %s17
    %p28 = scmp.ge.s32.totalorder %s27, 2
    %s29 = scalar_select %p28, 0, %s27
    %s30 = ssub.s32 %s17, %s29
    %s31 = ssub.s32 %s18, %s25
    %s32 = sor.u32 %s30, %s31
    %p33 = scmp.eq.s32.totalorder %s32, 0
    %s35 = sadd.s32 %s34, 1
    %s36 = scalar_select %p33, %s34, %s35
    %p39 = pneg %p33
    %p40 = scmp.eq.s32.totalorder %s10, 1
    %p41 = por %p39, %p40
    %p42 = scmp.ne.s32.totalorder %s34, %s37
    %p43 = scmp.eq.s32.totalorder %s10, 0
    %p44 = por %p42, %p43
    %p45 = scmp.ne.s32.totalorder %s34, %s37
    %p46 = scmp.eq.s32.totalorder %s15, 1
    %p47 = por %p45, %p46
    %p48 = scmp.ne.s32.totalorder %s37, %s38
    %p49 = scmp.eq.s32.totalorder %s15, 0
    %p50 = por %p48, %p49
    %p51 = scmp.ne.s32.totalorder %s37, %s38
    %p52 = scmp.eq.s32.totalorder %s16, 1
    %p53 = por %p51, %p52
    %p55 = scmp.ne.s32.totalorder %s38, %s54
    %p56 = scmp.eq.s32.totalorder %s16, 0
    %p57 = por %p55, %p56
    %s59 = sadd.s32 %s58, 1
    %p62 = scmp.eq.s32.totalorder %s10, 1
    %p63 = scmp.ne.s32.totalorder %s58, %s60
    %p64 = scmp.eq.s32.totalorder %s10, 0
    %p65 = por %p63, %p64
    %p66 = scmp.ne.s32.totalorder %s58, %s60
    %p67 = scmp.eq.s32.totalorder %s15, 1
    %p68 = por %p66, %p67
    %p69 = scmp.ne.s32.totalorder %s60, %s61
    %p70 = scmp.eq.s32.totalorder %s15, 0
    %p71 = por %p69, %p70
    %p72 = scmp.ne.s32.totalorder %s60, %s61
    %p73 = scmp.eq.s32.totalorder %s16, 1
    %p74 = por %p72, %p73
    %p76 = scmp.ne.s32.totalorder %s61, %s75
    %p77 = scmp.eq.s32.totalorder %s16, 0
    %p78 = por %p76, %p77
    %s80 = sadd.s32 %s79, 1
    %p83 = scmp.eq.s32.totalorder %s10, 1
    %p84 = scmp.ne.s32.totalorder %s79, %s81
    %p85 = scmp.eq.s32.totalorder %s10, 0
    %p86 = por %p84, %p85
    %p87 = scmp.ne.s32.totalorder %s79, %s81
    %p88 = scmp.eq.s32.totalorder %s15, 1
    %p89 = por %p87, %p88
    %p90 = scmp.ne.s32.totalorder %s81, %s82
    %p91 = scmp.eq.s32.totalorder %s15, 0
    %p92 = por %p90, %p91
    %p93 = scmp.ne.s32.totalorder %s81, %s82
    %p94 = scmp.eq.s32.totalorder %s16, 1
    %p95 = por %p93, %p94
    %p97 = scmp.ne.s32.totalorder %s82, %s96
    %p98 = scmp.eq.s32.totalorder %s16, 0
    %p99 = por %p97, %p98
    %s101 = sadd.s32 %s100, 1
    %p104 = scmp.eq.s32.totalorder %s10, 1
    %p105 = scmp.ne.s32.totalorder %s100, %s102
    %p106 = scmp.eq.s32.totalorder %s10, 0
    %p107 = por %p105, %p106
    %p108 = scmp.ne.s32.totalorder %s100, %s102
    %p109 = scmp.eq.s32.totalorder %s15, 1
    %p110 = por %p108, %p109
    %p111 = scmp.ne.s32.totalorder %s102, %s103
    %p112 = scmp.eq.s32.totalorder %s15, 0
    %p113 = por %p111, %p112
    %p114 = scmp.ne.s32.totalorder %s102, %s103
    %p115 = scmp.eq.s32.totalorder %s16, 1
    %p116 = por %p114, %p115
    %p118 = scmp.ne.s32.totalorder %s103, %s117
    %p119 = scmp.eq.s32.totalorder %s16, 0
    %p120 = por %p118, %p119
    %s121 = ssub.s32 %s17, %s29
    %s122 = ssub.s32 %s18, %s25
    %s123 = sor.u32 %s121, %s122
    %p124 = scmp.eq.s32.totalorder %s123, 0
    %s126 = sadd.s32 %s125, 1
    %s127 = scalar_select %p124, %s125, %s126
    %p130 = pneg %p124
    %p131 = scmp.eq.s32.totalorder %s10, 1
    %p132 = por %p130, %p131
    %p133 = scmp.ne.s32.totalorder %s125, %s128
    %p134 = scmp.eq.s32.totalorder %s10, 0
    %p135 = por %p133, %p134
    %p136 = scmp.ne.s32.totalorder %s125, %s128
    %p137 = scmp.eq.s32.totalorder %s15, 1
    %p138 = por %p136, %p137
    %p139 = scmp.ne.s32.totalorder %s128, %s129
    %p140 = scmp.eq.s32.totalorder %s15, 0
    %p141 = por %p139, %p140
    %p142 = scmp.ne.s32.totalorder %s128, %s129
    %p143 = scmp.eq.s32.totalorder %s16, 1
    %p144 = por %p142, %p143
    %p146 = scmp.ne.s32.totalorder %s129, %s145
    %p147 = scmp.eq.s32.totalorder %s16, 0
    %p148 = por %p146, %p147
    %p149 = scmp.le.s32.totalorder 1, %s10
    %p150 = scmp.lt.s32.totalorder %s10, 3
    %p151 = pnand %p149, %p150
    %p152 = pneg %p151
    // Predicated region
    $region9: #{tpu_custom_call.1} parent=5 // pred_check
      _
    $region10: #{tpu_custom_call.1} parent=5 // pred_check_branch
      %154 = sbr.rel (%p151) target = $region12
    $region11: #{tpu_custom_call.1} parent=5 // pred_region
      %s155 = ssub.s32 %s10, 1
      // Predicated region
      $region13: #{tpu_custom_call.1} parent=11 // pred_check
        %p156 = pneg %p71
      $region14: #{tpu_custom_call.1} parent=11 // pred_check_branch
        %158 = sbr.rel (%p156) target = $region16
      $region15: #{tpu_custom_call.1} parent=11 // pred_region
        _
      $region16: #{tpu_custom_call.1} parent=11 // pred_fallthru
        _
      // Predicated region
      $region17: #{tpu_custom_call.1} parent=11 // pred_check
        %p159 = pneg %p92
      $region18: #{tpu_custom_call.1} parent=11 // pred_check_branch
        %161 = sbr.rel (%p159) target = $region20
      $region19: #{tpu_custom_call.1} parent=11 // pred_region
        _
      $region20: #{tpu_custom_call.1} parent=11 // pred_fallthru
        _
      // Predicated region
      $region21: #{tpu_custom_call.1} parent=11 // pred_check
        %p162 = pneg %p113
      $region22: #{tpu_custom_call.1} parent=11 // pred_check_branch
        %164 = sbr.rel (%p162) target = $region24
      $region23: #{tpu_custom_call.1} parent=11 // pred_region
        _
      $region24: #{tpu_custom_call.1} parent=11 // pred_fallthru
        _
    $region12: #{tpu_custom_call.1} parent=5 // pred_fallthru
      _
    %p165 = scmp.lt.s32.totalorder %s10, 2
    // Predicated region
    $region25: #{tpu_custom_call.1} parent=5 // pred_check
      %p166 = pneg %p165
    $region26: #{tpu_custom_call.1} parent=5 // pred_check_branch
      %168 = sbr.rel (%p166) target = $region28
    $region27: #{tpu_custom_call.1} parent=5 // pred_region
      // Predicated region
      $region29: #{tpu_custom_call.1} parent=27 // pred_check
        %p169 = pneg %p44
      $region30: #{tpu_custom_call.1} parent=27 // pred_check_branch
        %171 = sbr.rel (%p169) target = $region32
      $region31: #{tpu_custom_call.1} parent=27 // pred_region
        %p172 = scmp.lt.s32.totalorder %s17, 1
        %s173 = scalar_select %p172, %s17, 1
        %p174 = scmp.lt.s32.totalorder %s18, 0
        %s175 = scalar_select %p174, %s18, 0
        %s176 = smul.addr %s175, 54
        %s177 = smul.addr %s173, 54
        %s178 = sadd.s32 %s176, %s177
        %s179 = smul.addr %s178, 8
        %s180 = scalar_lea.vmem %s0, %s179
      $region32: #{tpu_custom_call.1} parent=27 // pred_fallthru
        _
    $region28: #{tpu_custom_call.1} parent=5 // pred_fallthru
      _
    %p181 = scmp.le.s32.totalorder 1, %s10
    %p182 = scmp.lt.s32.totalorder %s10, 3
    %p183 = pnand %p181, %p182
    %p184 = pneg %p183
    // Predicated region
    $region33: #{tpu_custom_call.1} parent=5 // pred_check
      _
    $region34: #{tpu_custom_call.1} parent=5 // pred_check_branch
      %186 = sbr.rel (%p183) target = $region36
    $region35: #{tpu_custom_call.1} parent=5 // pred_region
      %s187 = ssub.s32 %s10, 1
      %p188 = scmp.lt.s32.totalorder %s19, 1
      %s189 = scalar_select %p188, %s19, 1
      %p190 = scmp.lt.s32.totalorder %s20, 0
      %s191 = scalar_select %p190, %s20, 0
      %s192 = smul.addr %s191, 54
      %s193 = smul.addr %s189, 54
      %s194 = sadd.s32 %s192, %s193
      %s195 = smul.addr %s194, 8
      %s196 = scalar_lea.vmem %s0, %s195
      %p197 = pneg %p50
      %p198 = pneg %p47
      %p199 = pneg %p71
      %p200 = pneg %p68
      %p201 = pneg %p92
      %p202 = pneg %p89
      %p203 = pneg %p113
      %p204 = pneg %p110
      %p205 = pneg %p141
      %p206 = pneg %p138
      %p207 = scmp.lt.s32.totalorder %s19, 1
      %s208 = scalar_select %p207, %s19, 1
      %p209 = scmp.lt.s32.totalorder %s20, 0
      %s210 = scalar_select %p209, %s20, 0
      %s211 = smul.addr %s210, 32
      %s212 = smul.addr %s208, 32
      %s213 = sadd.s32 %s211, %s212
      %s214 = smul.addr %s213, 8
      %s215 = scalar_lea.vmem %s4, %s214
      %p216 = scmp.lt.s32.totalorder %s19, 1
      %s217 = scalar_select %p216, %s19, 1
      %p218 = scmp.lt.s32.totalorder %s20, 0
      %s219 = scalar_select %p218, %s20, 0
      %s220 = smul.addr %s219, 54
      %s221 = smul.addr %s217, 54
      %s222 = sadd.s32 %s220, %s221
      %s223 = smul.addr %s222, 8
      %s224 = scalar_lea.vmem %s0, %s223
      %p225 = scmp.lt.s32.totalorder %s19, 1
      %s226 = scalar_select %p225, %s19, 1
      %p227 = scmp.lt.s32.totalorder %s20, 0
      %s228 = scalar_select %p227, %s20, 0
      %s229 = smul.addr %s228, 32
      %s230 = smul.addr %s226, 32
      %s231 = sadd.s32 %s229, %s230
      %s232 = smul.addr %s231, 8
      %s233 = scalar_lea.vmem %s4, %s232
      %v234 = vld [vmem:[%s224] sm:$0xff]
      %v235 = vld [vmem:[%s224 + $0x8] sm:$0xff]
      %v236 = vld [vmem:[%s224 + $0x10] sm:$0x3]
      %v237 = vld [vmem:[%s224 + $0x18] sm:$0xff]
      %v238 = vld [vmem:[%s224 + $0x20] sm:$0xff]
      %v239 = vld [vmem:[%s224 + $0x28] sm:$0x3]
      %v240 = vld [vmem:[%s224 + $0x30] sm:$0xff]
      %v241 = vld [vmem:[%s224 + $0x38] sm:$0xff]
      %v242 = vld [vmem:[%s224 + $0x40] sm:$0x3]
      %v243 = vld [vmem:[%s224 + $0x48] sm:$0xff]
      %v244 = vld [vmem:[%s224 + $0x50] sm:$0xff]
      %v245 = vld [vmem:[%s224 + $0x58] sm:$0x3]
      %v246 = vld [vmem:[%s224 + $0x60] sm:$0xff]
      %v247 = vld [vmem:[%s224 + $0x68] sm:$0xff]
      %v248 = vld [vmem:[%s224 + $0x70] sm:$0x3]
      %v249 = vld [vmem:[%s224 + $0x78] sm:$0xff]
      %v250 = vld [vmem:[%s224 + $0x80] sm:$0xff]
      %v251 = vld [vmem:[%s224 + $0x88] sm:$0x3]
      %v252 = vld [vmem:[%s224 + $0x90] sm:$0xff]
      %v253 = vld [vmem:[%s224 + $0x98] sm:$0xff]
      %v254 = vld [vmem:[%s224 + $0xa0] sm:$0x3]
      %v255 = vld [vmem:[%s224 + $0xa8] sm:$0xff]
      %v256 = vld [vmem:[%s224 + $0xb0] sm:$0xff]
      %v257 = vld [vmem:[%s224 + $0xb8] sm:$0x3]
      %v258 = vld [vmem:[%s224 + $0xc0] sm:$0xff]
      %v259 = vld [vmem:[%s224 + $0xc8] sm:$0xff]
      %v260 = vld [vmem:[%s224 + $0xd0] sm:$0x3]
      %v261 = vld [vmem:[%s224 + $0xd8] sm:$0xff]
      %v262 = vld [vmem:[%s224 + $0xe0] sm:$0xff]
      %v263 = vld [vmem:[%s224 + $0xe8] sm:$0x3]
      %v264 = vld [vmem:[%s224 + $0xf0] sm:$0xff]
      %v265 = vld [vmem:[%s224 + $0xf8] sm:$0xff]
      %v266 = vld [vmem:[%s224 + $0x100] sm:$0x3]
      %v267 = vld [vmem:[%s224 + $0x108] sm:$0xff]
      %v268 = vld [vmem:[%s224 + $0x110] sm:$0xff]
      %v269 = vld [vmem:[%s224 + $0x118] sm:$0x3]
      %v270 = vld [vmem:[%s224 + $0x120] sm:$0xff]
      %v271 = vld [vmem:[%s224 + $0x128] sm:$0xff]
      %v272 = vld [vmem:[%s224 + $0x130] sm:$0x3]
      %v273 = vld [vmem:[%s224 + $0x138] sm:$0xff]
      %v274 = vld [vmem:[%s224 + $0x140] sm:$0xff]
      %v275 = vld [vmem:[%s224 + $0x148] sm:$0x3]
      %v276 = vld [vmem:[%s224 + $0x150] sm:$0xff]
      %v277 = vld [vmem:[%s224 + $0x158] sm:$0xff]
      %v278 = vld [vmem:[%s224 + $0x160] sm:$0x3]
      %v279 = vld [vmem:[%s224 + $0x168] sm:$0xff]
      %v280 = vld [vmem:[%s224 + $0x170] sm:$0xff]
      %v281 = vld [vmem:[%s224 + $0x178] sm:$0x3]
      %v282 = vld [vmem:[%s224 + $0x180] sm:$0xff]
      %v283 = vld [vmem:[%s224 + $0x188] sm:$0xff]
      %v284 = vld [vmem:[%s224 + $0x190] sm:$0x3]
      %v285 = vld [vmem:[%s224 + $0x198] sm:$0xff]
      %v286 = vld [vmem:[%s224 + $0x1a0] sm:$0xff]
      %v287 = vld [vmem:[%s224 + $0x1a8] sm:$0x3]
      %vm336 = vcmask 1046528
      %v337 = vrot.slane %v234, 1
      %v338 = vrot.slane %v235, 1
      %v339 = vsel %vm336, %v337, %v338
      %v340 = vrot.slane %v236, 1
      %v341 = vsel %vm336, %v338, %v340
      %v342 = vrot.slane %v237, 1
      %v343 = vrot.slane %v238, 1
      %v344 = vsel %vm336, %v342, %v343
      %v345 = vrot.slane %v239, 1
      %v346 = vsel %vm336, %v343, %v345
      %v347 = vrot.slane %v240, 1
      %v348 = vrot.slane %v241, 1
      %v349 = vsel %vm336, %v347, %v348
      %v350 = vrot.slane %v242, 1
      %v351 = vsel %vm336, %v348, %v350
      %v352 = vrot.slane %v243, 1
      %v353 = vrot.slane %v244, 1
      %v354 = vsel %vm336, %v352, %v353
      %v355 = vrot.slane %v245, 1
      %v356 = vsel %vm336, %v353, %v355
      %v357 = vrot.slane %v246, 1
      %v358 = vrot.slane %v247, 1
      %v359 = vsel %vm336, %v357, %v358
      %v360 = vrot.slane %v248, 1
      %v361 = vsel %vm336, %v358, %v360
      %v362 = vrot.slane %v249, 1
      %v363 = vrot.slane %v250, 1
      %v364 = vsel %vm336, %v362, %v363
      %v365 = vrot.slane %v251, 1
      %v366 = vsel %vm336, %v363, %v365
      %v367 = vrot.slane %v252, 1
      %v368 = vrot.slane %v253, 1
      %v369 = vsel %vm336, %v367, %v368
      %v370 = vrot.slane %v254, 1
      %v371 = vsel %vm336, %v368, %v370
      %v372 = vrot.slane %v255, 1
      %v373 = vrot.slane %v256, 1
      %v374 = vsel %vm336, %v372, %v373
      %v375 = vrot.slane %v257, 1
      %v376 = vsel %vm336, %v373, %v375
      %v377 = vrot.slane %v258, 1
      %v378 = vrot.slane %v259, 1
      %v379 = vsel %vm336, %v377, %v378
      %v380 = vrot.slane %v260, 1
      %v381 = vsel %vm336, %v378, %v380
      %v382 = vrot.slane %v261, 1
      %v383 = vrot.slane %v262, 1
      %v384 = vsel %vm336, %v382, %v383
      %v385 = vrot.slane %v263, 1
      %v386 = vsel %vm336, %v383, %v385
      %v387 = vrot.slane %v264, 1
      %v388 = vrot.slane %v265, 1
      %v389 = vsel %vm336, %v387, %v388
      %v390 = vrot.slane %v266, 1
      %v391 = vsel %vm336, %v388, %v390
      %v392 = vrot.slane %v267, 1
      %v393 = vrot.slane %v268, 1
      %v394 = vsel %vm336, %v392, %v393
      %v395 = vrot.slane %v269, 1
      %v396 = vsel %vm336, %v393, %v395
      %v397 = vrot.slane %v270, 1
      %v398 = vrot.slane %v271, 1
      %v399 = vsel %vm336, %v397, %v398
      %v400 = vrot.slane %v272, 1
      %v401 = vsel %vm336, %v398, %v400
      %v402 = vrot.slane %v273, 1
      %v403 = vrot.slane %v274, 1
      %v404 = vsel %vm336, %v402, %v403
      %v405 = vrot.slane %v275, 1
      %v406 = vsel %vm336, %v403, %v405
      %v407 = vrot.slane %v276, 1
      %v408 = vrot.slane %v277, 1
      %v409 = vsel %vm336, %v407, %v408
      %v410 = vrot.slane %v278, 1
      %v411 = vsel %vm336, %v408, %v410
      %v412 = vrot.slane %v279, 1
      %v413 = vrot.slane %v280, 1
      %v414 = vsel %vm336, %v412, %v413
      %v415 = vrot.slane %v281, 1
      %v416 = vsel %vm336, %v413, %v415
      %vm417 = vcmask 1045504
      %v418 = vrot.slane %v234, 2
      %v419 = vrot.slane %v235, 2
      %v420 = vsel %vm417, %v418, %v419
      %v421 = vrot.slane %v236, 2
      %v422 = vsel %vm417, %v419, %v421
      %v423 = vrot.slane %v237, 2
      %v424 = vrot.slane %v238, 2
      %v425 = vsel %vm417, %v423, %v424
      %v426 = vrot.slane %v239, 2
      %v427 = vsel %vm417, %v424, %v426
      %v428 = vrot.slane %v240, 2
      %v429 = vrot.slane %v241, 2
      %v430 = vsel %vm417, %v428, %v429
      %v431 = vrot.slane %v242, 2
      %v432 = vsel %vm417, %v429, %v431
      %v433 = vrot.slane %v243, 2
      %v434 = vrot.slane %v244, 2
      %v435 = vsel %vm417, %v433, %v434
      %v436 = vrot.slane %v245, 2
      %v437 = vsel %vm417, %v434, %v436
      %v438 = vrot.slane %v246, 2
      %v439 = vrot.slane %v247, 2
      %v440 = vsel %vm417, %v438, %v439
      %v441 = vrot.slane %v248, 2
      %v442 = vsel %vm417, %v439, %v441
      %v443 = vrot.slane %v249, 2
      %v444 = vrot.slane %v250, 2
      %v445 = vsel %vm417, %v443, %v444
      %v446 = vrot.slane %v251, 2
      %v447 = vsel %vm417, %v444, %v446
      %v448 = vrot.slane %v252, 2
      %v449 = vrot.slane %v253, 2
      %v450 = vsel %vm417, %v448, %v449
      %v451 = vrot.slane %v254, 2
      %v452 = vsel %vm417, %v449, %v451
      %v453 = vrot.slane %v255, 2
      %v454 = vrot.slane %v256, 2
      %v455 = vsel %vm417, %v453, %v454
      %v456 = vrot.slane %v257, 2
      %v457 = vsel %vm417, %v454, %v456
      %v458 = vrot.slane %v258, 2
      %v459 = vrot.slane %v259, 2
      %v460 = vsel %vm417, %v458, %v459
      %v461 = vrot.slane %v260, 2
      %v462 = vsel %vm417, %v459, %v461
      %v463 = vrot.slane %v261, 2
      %v464 = vrot.slane %v262, 2
      %v465 = vsel %vm417, %v463, %v464
      %v466 = vrot.slane %v263, 2
      %v467 = vsel %vm417, %v464, %v466
      %v468 = vrot.slane %v264, 2
      %v469 = vrot.slane %v265, 2
      %v470 = vsel %vm417, %v468, %v469
      %v471 = vrot.slane %v266, 2
      %v472 = vsel %vm417, %v469, %v471
      %v473 = vrot.slane %v267, 2
      %v474 = vrot.slane %v268, 2
      %v475 = vsel %vm417, %v473, %v474
      %v476 = vrot.slane %v269, 2
      %v477 = vsel %vm417, %v474, %v476
      %v478 = vrot.slane %v270, 2
      %v479 = vrot.slane %v271, 2
      %v480 = vsel %vm417, %v478, %v479
      %v481 = vrot.slane %v272, 2
      %v482 = vsel %vm417, %v479, %v481
      %v483 = vrot.slane %v273, 2
      %v484 = vrot.slane %v274, 2
      %v485 = vsel %vm417, %v483, %v484
      %v486 = vrot.slane %v275, 2
      %v487 = vsel %vm417, %v484, %v486
      %v488 = vrot.slane %v276, 2
      %v489 = vrot.slane %v277, 2
      %v490 = vsel %vm417, %v488, %v489
      %v491 = vrot.slane %v278, 2
      %v492 = vsel %vm417, %v489, %v491
      %v493 = vrot.slane %v279, 2
      %v494 = vrot.slane %v280, 2
      %v495 = vsel %vm417, %v493, %v494
      %v496 = vrot.slane %v281, 2
      %v497 = vsel %vm417, %v494, %v496
      %v501 = vrot.slane %v282, 1
      %v502 = vrot.slane %v283, 1
      %v503 = vsel %vm336, %v501, %v502
      %v504 = vrot.slane %v284, 1
      %v505 = vsel %vm336, %v502, %v504
      %v538 = vrot.slane %v282, 2
      %v539 = vrot.slane %v283, 2
      %v540 = vsel %vm417, %v538, %v539
      %v541 = vrot.slane %v284, 2
      %v542 = vsel %vm417, %v539, %v541
      %v546 = vrot.slane %v285, 1
      %v547 = vrot.slane %v286, 1
      %v548 = vsel %vm336, %v546, %v547
      %v549 = vrot.slane %v287, 1
      %v550 = vsel %vm336, %v547, %v549
      %v551 = vrot.slane %v285, 2
      %v552 = vrot.slane %v286, 2
      %v553 = vsel %vm417, %v551, %v552
      %v554 = vrot.slane %v287, 2
      %v555 = vsel %vm417, %v552, %v554
      %556 = vrot.lane.b32.xlu0 %v339, 4
      %v557 = vpop.permute.xlu0 %556
      %558 = vrot.lane.b32.xlu0 %v341, 4
      %v559 = vpop.permute.xlu0 %558
      %560 = vrot.lane.b32.xlu0 %v344, 4
      %v561 = vpop.permute.xlu0 %560
      %562 = vrot.lane.b32.xlu0 %v346, 4
      %v563 = vpop.permute.xlu0 %562
      %564 = vrot.lane.b32.xlu0 %v349, 4
      %v565 = vpop.permute.xlu0 %564
      %566 = vrot.lane.b32.xlu0 %v351, 4
      %v567 = vpop.permute.xlu0 %566
      %568 = vrot.lane.b32.xlu0 %v354, 4
      %v569 = vpop.permute.xlu0 %568
      %570 = vrot.lane.b32.xlu0 %v356, 4
      %v571 = vpop.permute.xlu0 %570
      %572 = vrot.lane.b32.xlu0 %v359, 4
      %v573 = vpop.permute.xlu0 %572
      %574 = vrot.lane.b32.xlu0 %v361, 4
      %v575 = vpop.permute.xlu0 %574
      %576 = vrot.lane.b32.xlu0 %v364, 4
      %v577 = vpop.permute.xlu0 %576
      %578 = vrot.lane.b32.xlu0 %v366, 4
      %v579 = vpop.permute.xlu0 %578
      %580 = vrot.lane.b32.xlu0 %v369, 4
      %v581 = vpop.permute.xlu0 %580
      %582 = vrot.lane.b32.xlu0 %v371, 4
      %v583 = vpop.permute.xlu0 %582
      %584 = vrot.lane.b32.xlu0 %v374, 4
      %v585 = vpop.permute.xlu0 %584
      %586 = vrot.lane.b32.xlu0 %v376, 4
      %v587 = vpop.permute.xlu0 %586
      %588 = vrot.lane.b32.xlu0 %v379, 4
      %v589 = vpop.permute.xlu0 %588
      %590 = vrot.lane.b32.xlu0 %v381, 4
      %v591 = vpop.permute.xlu0 %590
      %592 = vrot.lane.b32.xlu0 %v384, 4
      %v593 = vpop.permute.xlu0 %592
      %594 = vrot.lane.b32.xlu0 %v386, 4
      %v595 = vpop.permute.xlu0 %594
      %596 = vrot.lane.b32.xlu0 %v389, 4
      %v597 = vpop.permute.xlu0 %596
      %598 = vrot.lane.b32.xlu0 %v391, 4
      %v599 = vpop.permute.xlu0 %598
      %600 = vrot.lane.b32.xlu0 %v394, 4
      %v601 = vpop.permute.xlu0 %600
      %602 = vrot.lane.b32.xlu0 %v396, 4
      %v603 = vpop.permute.xlu0 %602
      %604 = vrot.lane.b32.xlu0 %v399, 4
      %v605 = vpop.permute.xlu0 %604
      %606 = vrot.lane.b32.xlu0 %v401, 4
      %v607 = vpop.permute.xlu0 %606
      %608 = vrot.lane.b32.xlu0 %v404, 4
      %v609 = vpop.permute.xlu0 %608
      %610 = vrot.lane.b32.xlu0 %v406, 4
      %v611 = vpop.permute.xlu0 %610
      %612 = vrot.lane.b32.xlu0 %v409, 4
      %v613 = vpop.permute.xlu0 %612
      %614 = vrot.lane.b32.xlu0 %v411, 4
      %v615 = vpop.permute.xlu0 %614
      %616 = vrot.lane.b32.xlu0 %v414, 4
      %v617 = vpop.permute.xlu0 %616
      %618 = vrot.lane.b32.xlu0 %v416, 4
      %v619 = vpop.permute.xlu0 %618
      %652 = vrot.lane.b32.xlu0 %v420, 8
      %v653 = vpop.permute.xlu0 %652
      %654 = vrot.lane.b32.xlu0 %v422, 8
      %v655 = vpop.permute.xlu0 %654
      %656 = vrot.lane.b32.xlu0 %v425, 8
      %v657 = vpop.permute.xlu0 %656
      %658 = vrot.lane.b32.xlu0 %v427, 8
      %v659 = vpop.permute.xlu0 %658
      %660 = vrot.lane.b32.xlu0 %v430, 8
      %v661 = vpop.permute.xlu0 %660
      %662 = vrot.lane.b32.xlu0 %v432, 8
      %v663 = vpop.permute.xlu0 %662
      %664 = vrot.lane.b32.xlu0 %v435, 8
      %v665 = vpop.permute.xlu0 %664
      %666 = vrot.lane.b32.xlu0 %v437, 8
      %v667 = vpop.permute.xlu0 %666
      %668 = vrot.lane.b32.xlu0 %v440, 8
      %v669 = vpop.permute.xlu0 %668
      %670 = vrot.lane.b32.xlu0 %v442, 8
      %v671 = vpop.permute.xlu0 %670
      %672 = vrot.lane.b32.xlu0 %v445, 8
      %v673 = vpop.permute.xlu0 %672
      %674 = vrot.lane.b32.xlu0 %v447, 8
      %v675 = vpop.permute.xlu0 %674
      %676 = vrot.lane.b32.xlu0 %v450, 8
      %v677 = vpop.permute.xlu0 %676
      %678 = vrot.lane.b32.xlu0 %v452, 8
      %v679 = vpop.permute.xlu0 %678
      %680 = vrot.lane.b32.xlu0 %v455, 8
      %v681 = vpop.permute.xlu0 %680
      %682 = vrot.lane.b32.xlu0 %v457, 8
      %v683 = vpop.permute.xlu0 %682
      %684 = vrot.lane.b32.xlu0 %v460, 8
      %v685 = vpop.permute.xlu0 %684
      %686 = vrot.lane.b32.xlu0 %v462, 8
      %v687 = vpop.permute.xlu0 %686
      %688 = vrot.lane.b32.xlu0 %v465, 8
      %v689 = vpop.permute.xlu0 %688
      %690 = vrot.lane.b32.xlu0 %v467, 8
      %v691 = vpop.permute.xlu0 %690
      %692 = vrot.lane.b32.xlu0 %v470, 8
      %v693 = vpop.permute.xlu0 %692
      %694 = vrot.lane.b32.xlu0 %v472, 8
      %v695 = vpop.permute.xlu0 %694
      %696 = vrot.lane.b32.xlu0 %v475, 8
      %v697 = vpop.permute.xlu0 %696
      %698 = vrot.lane.b32.xlu0 %v477, 8
      %v699 = vpop.permute.xlu0 %698
      %700 = vrot.lane.b32.xlu0 %v480, 8
      %v701 = vpop.permute.xlu0 %700
      %702 = vrot.lane.b32.xlu0 %v482, 8
      %v703 = vpop.permute.xlu0 %702
      %704 = vrot.lane.b32.xlu0 %v485, 8
      %v705 = vpop.permute.xlu0 %704
      %706 = vrot.lane.b32.xlu0 %v487, 8
      %v707 = vpop.permute.xlu0 %706
      %708 = vrot.lane.b32.xlu0 %v490, 8
      %v709 = vpop.permute.xlu0 %708
      %710 = vrot.lane.b32.xlu0 %v492, 8
      %v711 = vpop.permute.xlu0 %710
      %712 = vrot.lane.b32.xlu0 %v495, 8
      %v713 = vpop.permute.xlu0 %712
      %714 = vrot.lane.b32.xlu0 %v497, 8
      %v715 = vpop.permute.xlu0 %714
      %748 = vrot.lane.b32.xlu0 %v237, 12
      %v749 = vpop.permute.xlu0 %748
      %750 = vrot.lane.b32.xlu0 %v238, 12
      %v751 = vpop.permute.xlu0 %750
      %752 = vrot.lane.b32.xlu0 %v240, 12
      %v753 = vpop.permute.xlu0 %752
      %754 = vrot.lane.b32.xlu0 %v241, 12
      %v755 = vpop.permute.xlu0 %754
      %756 = vrot.lane.b32.xlu0 %v243, 12
      %v757 = vpop.permute.xlu0 %756
      %758 = vrot.lane.b32.xlu0 %v244, 12
      %v759 = vpop.permute.xlu0 %758
      %760 = vrot.lane.b32.xlu0 %v246, 12
      %v761 = vpop.permute.xlu0 %760
      %762 = vrot.lane.b32.xlu0 %v247, 12
      %v763 = vpop.permute.xlu0 %762
      %764 = vrot.lane.b32.xlu0 %v249, 12
      %v765 = vpop.permute.xlu0 %764
      %766 = vrot.lane.b32.xlu0 %v250, 12
      %v767 = vpop.permute.xlu0 %766
      %768 = vrot.lane.b32.xlu0 %v252, 12
      %v769 = vpop.permute.xlu0 %768
      %770 = vrot.lane.b32.xlu0 %v253, 12
      %v771 = vpop.permute.xlu0 %770
      %772 = vrot.lane.b32.xlu0 %v255, 12
      %v773 = vpop.permute.xlu0 %772
      %774 = vrot.lane.b32.xlu0 %v256, 12
      %v775 = vpop.permute.xlu0 %774
      %776 = vrot.lane.b32.xlu0 %v258, 12
      %v777 = vpop.permute.xlu0 %776
      %778 = vrot.lane.b32.xlu0 %v259, 12
      %v779 = vpop.permute.xlu0 %778
      %780 = vrot.lane.b32.xlu0 %v261, 12
      %v781 = vpop.permute.xlu0 %780
      %782 = vrot.lane.b32.xlu0 %v262, 12
      %v783 = vpop.permute.xlu0 %782
      %784 = vrot.lane.b32.xlu0 %v264, 12
      %v785 = vpop.permute.xlu0 %784
      %786 = vrot.lane.b32.xlu0 %v265, 12
      %v787 = vpop.permute.xlu0 %786
      %788 = vrot.lane.b32.xlu0 %v267, 12
      %v789 = vpop.permute.xlu0 %788
      %790 = vrot.lane.b32.xlu0 %v268, 12
      %v791 = vpop.permute.xlu0 %790
      %792 = vrot.lane.b32.xlu0 %v270, 12
      %v793 = vpop.permute.xlu0 %792
      %794 = vrot.lane.b32.xlu0 %v271, 12
      %v795 = vpop.permute.xlu0 %794
      %796 = vrot.lane.b32.xlu0 %v273, 12
      %v797 = vpop.permute.xlu0 %796
      %798 = vrot.lane.b32.xlu0 %v274, 12
      %v799 = vpop.permute.xlu0 %798
      %800 = vrot.lane.b32.xlu0 %v276, 12
      %v801 = vpop.permute.xlu0 %800
      %802 = vrot.lane.b32.xlu0 %v277, 12
      %v803 = vpop.permute.xlu0 %802
      %804 = vrot.lane.b32.xlu0 %v279, 12
      %v805 = vpop.permute.xlu0 %804
      %806 = vrot.lane.b32.xlu0 %v280, 12
      %v807 = vpop.permute.xlu0 %806
      %808 = vrot.lane.b32.xlu0 %v282, 12
      %v809 = vpop.permute.xlu0 %808
      %810 = vrot.lane.b32.xlu0 %v283, 12
      %v811 = vpop.permute.xlu0 %810
      %844 = vrot.lane.b32.xlu0 %v344, 16
      %v845 = vpop.permute.xlu0 %844
      %846 = vrot.lane.b32.xlu0 %v346, 16
      %v847 = vpop.permute.xlu0 %846
      %848 = vrot.lane.b32.xlu0 %v349, 16
      %v849 = vpop.permute.xlu0 %848
      %850 = vrot.lane.b32.xlu0 %v351, 16
      %v851 = vpop.permute.xlu0 %850
      %852 = vrot.lane.b32.xlu0 %v354, 16
      %v853 = vpop.permute.xlu0 %852
      %854 = vrot.lane.b32.xlu0 %v356, 16
      %v855 = vpop.permute.xlu0 %854
      %856 = vrot.lane.b32.xlu0 %v359, 16
      %v857 = vpop.permute.xlu0 %856
      %858 = vrot.lane.b32.xlu0 %v361, 16
      %v859 = vpop.permute.xlu0 %858
      %860 = vrot.lane.b32.xlu0 %v364, 16
      %v861 = vpop.permute.xlu0 %860
      %862 = vrot.lane.b32.xlu0 %v366, 16
      %v863 = vpop.permute.xlu0 %862
      %864 = vrot.lane.b32.xlu0 %v369, 16
      %v865 = vpop.permute.xlu0 %864
      %866 = vrot.lane.b32.xlu0 %v371, 16
      %v867 = vpop.permute.xlu0 %866
      %868 = vrot.lane.b32.xlu0 %v374, 16
      %v869 = vpop.permute.xlu0 %868
      %870 = vrot.lane.b32.xlu0 %v376, 16
      %v871 = vpop.permute.xlu0 %870
      %872 = vrot.lane.b32.xlu0 %v379, 16
      %v873 = vpop.permute.xlu0 %872
      %874 = vrot.lane.b32.xlu0 %v381, 16
      %v875 = vpop.permute.xlu0 %874
      %876 = vrot.lane.b32.xlu0 %v384, 16
      %v877 = vpop.permute.xlu0 %876
      %878 = vrot.lane.b32.xlu0 %v386, 16
      %v879 = vpop.permute.xlu0 %878
      %880 = vrot.lane.b32.xlu0 %v389, 16
      %v881 = vpop.permute.xlu0 %880
      %882 = vrot.lane.b32.xlu0 %v391, 16
      %v883 = vpop.permute.xlu0 %882
      %884 = vrot.lane.b32.xlu0 %v394, 16
      %v885 = vpop.permute.xlu0 %884
      %886 = vrot.lane.b32.xlu0 %v396, 16
      %v887 = vpop.permute.xlu0 %886
      %888 = vrot.lane.b32.xlu0 %v399, 16
      %v889 = vpop.permute.xlu0 %888
      %890 = vrot.lane.b32.xlu0 %v401, 16
      %v891 = vpop.permute.xlu0 %890
      %892 = vrot.lane.b32.xlu0 %v404, 16
      %v893 = vpop.permute.xlu0 %892
      %894 = vrot.lane.b32.xlu0 %v406, 16
      %v895 = vpop.permute.xlu0 %894
      %896 = vrot.lane.b32.xlu0 %v409, 16
      %v897 = vpop.permute.xlu0 %896
      %898 = vrot.lane.b32.xlu0 %v411, 16
      %v899 = vpop.permute.xlu0 %898
      %900 = vrot.lane.b32.xlu0 %v414, 16
      %v901 = vpop.permute.xlu0 %900
      %902 = vrot.lane.b32.xlu0 %v416, 16
      %v903 = vpop.permute.xlu0 %902
      %904 = vrot.lane.b32.xlu0 %v503, 16
      %v905 = vpop.permute.xlu0 %904
      %906 = vrot.lane.b32.xlu0 %v505, 16
      %v907 = vpop.permute.xlu0 %906
      %940 = vrot.lane.b32.xlu0 %v425, 20
      %v941 = vpop.permute.xlu0 %940
      %942 = vrot.lane.b32.xlu0 %v427, 20
      %v943 = vpop.permute.xlu0 %942
      %944 = vrot.lane.b32.xlu0 %v430, 20
      %v945 = vpop.permute.xlu0 %944
      %946 = vrot.lane.b32.xlu0 %v432, 20
      %v947 = vpop.permute.xlu0 %946
      %948 = vrot.lane.b32.xlu0 %v435, 20
      %v949 = vpop.permute.xlu0 %948
      %950 = vrot.lane.b32.xlu0 %v437, 20
      %v951 = vpop.permute.xlu0 %950
      %952 = vrot.lane.b32.xlu0 %v440, 20
      %v953 = vpop.permute.xlu0 %952
      %954 = vrot.lane.b32.xlu0 %v442, 20
      %v955 = vpop.permute.xlu0 %954
      %956 = vrot.lane.b32.xlu0 %v445, 20
      %v957 = vpop.permute.xlu0 %956
      %958 = vrot.lane.b32.xlu0 %v447, 20
      %v959 = vpop.permute.xlu0 %958
      %960 = vrot.lane.b32.xlu0 %v450, 20
      %v961 = vpop.permute.xlu0 %960
      %962 = vrot.lane.b32.xlu0 %v452, 20
      %v963 = vpop.permute.xlu0 %962
      %964 = vrot.lane.b32.xlu0 %v455, 20
      %v965 = vpop.permute.xlu0 %964
      %966 = vrot.lane.b32.xlu0 %v457, 20
      %v967 = vpop.permute.xlu0 %966
      %968 = vrot.lane.b32.xlu0 %v460, 20
      %v969 = vpop.permute.xlu0 %968
      %970 = vrot.lane.b32.xlu0 %v462, 20
      %v971 = vpop.permute.xlu0 %970
      %972 = vrot.lane.b32.xlu0 %v465, 20
      %v973 = vpop.permute.xlu0 %972
      %974 = vrot.lane.b32.xlu0 %v467, 20
      %v975 = vpop.permute.xlu0 %974
      %976 = vrot.lane.b32.xlu0 %v470, 20
      %v977 = vpop.permute.xlu0 %976
      %978 = vrot.lane.b32.xlu0 %v472, 20
      %v979 = vpop.permute.xlu0 %978
      %980 = vrot.lane.b32.xlu0 %v475, 20
      %v981 = vpop.permute.xlu0 %980
      %982 = vrot.lane.b32.xlu0 %v477, 20
      %v983 = vpop.permute.xlu0 %982
      %984 = vrot.lane.b32.xlu0 %v480, 20
      %v985 = vpop.permute.xlu0 %984
      %986 = vrot.lane.b32.xlu0 %v482, 20
      %v987 = vpop.permute.xlu0 %986
      %988 = vrot.lane.b32.xlu0 %v485, 20
      %v989 = vpop.permute.xlu0 %988
      %990 = vrot.lane.b32.xlu0 %v487, 20
      %v991 = vpop.permute.xlu0 %990
      %992 = vrot.lane.b32.xlu0 %v490, 20
      %v993 = vpop.permute.xlu0 %992
      %994 = vrot.lane.b32.xlu0 %v492, 20
      %v995 = vpop.permute.xlu0 %994
      %996 = vrot.lane.b32.xlu0 %v495, 20
      %v997 = vpop.permute.xlu0 %996
      %998 = vrot.lane.b32.xlu0 %v497, 20
      %v999 = vpop.permute.xlu0 %998
      %1000 = vrot.lane.b32.xlu0 %v540, 20
      %v1001 = vpop.permute.xlu0 %1000
      %1002 = vrot.lane.b32.xlu0 %v542, 20
      %v1003 = vpop.permute.xlu0 %1002
      %1036 = vrot.lane.b32.xlu0 %v240, 24
      %v1037 = vpop.permute.xlu0 %1036
      %1038 = vrot.lane.b32.xlu0 %v241, 24
      %v1039 = vpop.permute.xlu0 %1038
      %1040 = vrot.lane.b32.xlu0 %v243, 24
      %v1041 = vpop.permute.xlu0 %1040
      %1042 = vrot.lane.b32.xlu0 %v244, 24
      %v1043 = vpop.permute.xlu0 %1042
      %1044 = vrot.lane.b32.xlu0 %v246, 24
      %v1045 = vpop.permute.xlu0 %1044
      %1046 = vrot.lane.b32.xlu0 %v247, 24
      %v1047 = vpop.permute.xlu0 %1046
      %1048 = vrot.lane.b32.xlu0 %v249, 24
      %v1049 = vpop.permute.xlu0 %1048
      %1050 = vrot.lane.b32.xlu0 %v250, 24
      %v1051 = vpop.permute.xlu0 %1050
      %1052 = vrot.lane.b32.xlu0 %v252, 24
      %v1053 = vpop.permute.xlu0 %1052
      %1054 = vrot.lane.b32.xlu0 %v253, 24
      %v1055 = vpop.permute.xlu0 %1054
      %1056 = vrot.lane.b32.xlu0 %v255, 24
      %v1057 = vpop.permute.xlu0 %1056
      %1058 = vrot.lane.b32.xlu0 %v256, 24
      %v1059 = vpop.permute.xlu0 %1058
      %1060 = vrot.lane.b32.xlu0 %v258, 24
      %v1061 = vpop.permute.xlu0 %1060
      %1062 = vrot.lane.b32.xlu0 %v259, 24
      %v1063 = vpop.permute.xlu0 %1062
      %1064 = vrot.lane.b32.xlu0 %v261, 24
      %v1065 = vpop.permute.xlu0 %1064
      %1066 = vrot.lane.b32.xlu0 %v262, 24
      %v1067 = vpop.permute.xlu0 %1066
      %1068 = vrot.lane.b32.xlu0 %v264, 24
      %v1069 = vpop.permute.xlu0 %1068
      %1070 = vrot.lane.b32.xlu0 %v265, 24
      %v1071 = vpop.permute.xlu0 %1070
      %1072 = vrot.lane.b32.xlu0 %v267, 24
      %v1073 = vpop.permute.xlu0 %1072
      %1074 = vrot.lane.b32.xlu0 %v268, 24
      %v1075 = vpop.permute.xlu0 %1074
      %1076 = vrot.lane.b32.xlu0 %v270, 24
      %v1077 = vpop.permute.xlu0 %1076
      %1078 = vrot.lane.b32.xlu0 %v271, 24
      %v1079 = vpop.permute.xlu0 %1078
      %1080 = vrot.lane.b32.xlu0 %v273, 24
      %v1081 = vpop.permute.xlu0 %1080
      %1082 = vrot.lane.b32.xlu0 %v274, 24
      %v1083 = vpop.permute.xlu0 %1082
      %1084 = vrot.lane.b32.xlu0 %v276, 24
      %v1085 = vpop.permute.xlu0 %1084
      %1086 = vrot.lane.b32.xlu0 %v277, 24
      %v1087 = vpop.permute.xlu0 %1086
      %1088 = vrot.lane.b32.xlu0 %v279, 24
      %v1089 = vpop.permute.xlu0 %1088
      %1090 = vrot.lane.b32.xlu0 %v280, 24
      %v1091 = vpop.permute.xlu0 %1090
      %1092 = vrot.lane.b32.xlu0 %v282, 24
      %v1093 = vpop.permute.xlu0 %1092
      %1094 = vrot.lane.b32.xlu0 %v283, 24
      %v1095 = vpop.permute.xlu0 %1094
      %1096 = vrot.lane.b32.xlu0 %v285, 24
      %v1097 = vpop.permute.xlu0 %1096
      %1098 = vrot.lane.b32.xlu0 %v286, 24
      %v1099 = vpop.permute.xlu0 %1098
      %1132 = vrot.lane.b32.xlu0 %v349, 28
      %v1133 = vpop.permute.xlu0 %1132
      %1134 = vrot.lane.b32.xlu0 %v351, 28
      %v1135 = vpop.permute.xlu0 %1134
      %1136 = vrot.lane.b32.xlu0 %v354, 28
      %v1137 = vpop.permute.xlu0 %1136
      %1138 = vrot.lane.b32.xlu0 %v356, 28
      %v1139 = vpop.permute.xlu0 %1138
      %1140 = vrot.lane.b32.xlu0 %v359, 28
      %v1141 = vpop.permute.xlu0 %1140
      %1142 = vrot.lane.b32.xlu0 %v361, 28
      %v1143 = vpop.permute.xlu0 %1142
      %1144 = vrot.lane.b32.xlu0 %v364, 28
      %v1145 = vpop.permute.xlu0 %1144
      %1146 = vrot.lane.b32.xlu0 %v366, 28
      %v1147 = vpop.permute.xlu0 %1146
      %1148 = vrot.lane.b32.xlu0 %v369, 28
      %v1149 = vpop.permute.xlu0 %1148
      %1150 = vrot.lane.b32.xlu0 %v371, 28
      %v1151 = vpop.permute.xlu0 %1150
      %1152 = vrot.lane.b32.xlu0 %v374, 28
      %v1153 = vpop.permute.xlu0 %1152
      %1154 = vrot.lane.b32.xlu0 %v376, 28
      %v1155 = vpop.permute.xlu0 %1154
      %1156 = vrot.lane.b32.xlu0 %v379, 28
      %v1157 = vpop.permute.xlu0 %1156
      %1158 = vrot.lane.b32.xlu0 %v381, 28
      %v1159 = vpop.permute.xlu0 %1158
      %1160 = vrot.lane.b32.xlu0 %v384, 28
      %v1161 = vpop.permute.xlu0 %1160
      %1162 = vrot.lane.b32.xlu0 %v386, 28
      %v1163 = vpop.permute.xlu0 %1162
      %1164 = vrot.lane.b32.xlu0 %v389, 28
      %v1165 = vpop.permute.xlu0 %1164
      %1166 = vrot.lane.b32.xlu0 %v391, 28
      %v1167 = vpop.permute.xlu0 %1166
      %1168 = vrot.lane.b32.xlu0 %v394, 28
      %v1169 = vpop.permute.xlu0 %1168
      %1170 = vrot.lane.b32.xlu0 %v396, 28
      %v1171 = vpop.permute.xlu0 %1170
      %1172 = vrot.lane.b32.xlu0 %v399, 28
      %v1173 = vpop.permute.xlu0 %1172
      %1174 = vrot.lane.b32.xlu0 %v401, 28
      %v1175 = vpop.permute.xlu0 %1174
      %1176 = vrot.lane.b32.xlu0 %v404, 28
      %v1177 = vpop.permute.xlu0 %1176
      %1178 = vrot.lane.b32.xlu0 %v406, 28
      %v1179 = vpop.permute.xlu0 %1178
      %1180 = vrot.lane.b32.xlu0 %v409, 28
      %v1181 = vpop.permute.xlu0 %1180
      %1182 = vrot.lane.b32.xlu0 %v411, 28
      %v1183 = vpop.permute.xlu0 %1182
      %1184 = vrot.lane.b32.xlu0 %v414, 28
      %v1185 = vpop.permute.xlu0 %1184
      %1186 = vrot.lane.b32.xlu0 %v416, 28
      %v1187 = vpop.permute.xlu0 %1186
      %1188 = vrot.lane.b32.xlu0 %v503, 28
      %v1189 = vpop.permute.xlu0 %1188
      %1190 = vrot.lane.b32.xlu0 %v505, 28
      %v1191 = vpop.permute.xlu0 %1190
      %1192 = vrot.lane.b32.xlu0 %v548, 28
      %v1193 = vpop.permute.xlu0 %1192
      %1194 = vrot.lane.b32.xlu0 %v550, 28
      %v1195 = vpop.permute.xlu0 %1194
      %1228 = vrot.lane.b32.xlu0 %v430, 32
      %v1229 = vpop.permute.xlu0 %1228
      %1230 = vrot.lane.b32.xlu0 %v432, 32
      %v1231 = vpop.permute.xlu0 %1230
      %1232 = vrot.lane.b32.xlu0 %v435, 32
      %v1233 = vpop.permute.xlu0 %1232
      %1234 = vrot.lane.b32.xlu0 %v437, 32
      %v1235 = vpop.permute.xlu0 %1234
      %1236 = vrot.lane.b32.xlu0 %v440, 32
      %v1237 = vpop.permute.xlu0 %1236
      %1238 = vrot.lane.b32.xlu0 %v442, 32
      %v1239 = vpop.permute.xlu0 %1238
      %1240 = vrot.lane.b32.xlu0 %v445, 32
      %v1241 = vpop.permute.xlu0 %1240
      %1242 = vrot.lane.b32.xlu0 %v447, 32
      %v1243 = vpop.permute.xlu0 %1242
      %1244 = vrot.lane.b32.xlu0 %v450, 32
      %v1245 = vpop.permute.xlu0 %1244
      %1246 = vrot.lane.b32.xlu0 %v452, 32
      %v1247 = vpop.permute.xlu0 %1246
      %1248 = vrot.lane.b32.xlu0 %v455, 32
      %v1249 = vpop.permute.xlu0 %1248
      %1250 = vrot.lane.b32.xlu0 %v457, 32
      %v1251 = vpop.permute.xlu0 %1250
      %1252 = vrot.lane.b32.xlu0 %v460, 32
      %v1253 = vpop.permute.xlu0 %1252
      %1254 = vrot.lane.b32.xlu0 %v462, 32
      %v1255 = vpop.permute.xlu0 %1254
      %1256 = vrot.lane.b32.xlu0 %v465, 32
      %v1257 = vpop.permute.xlu0 %1256
      %1258 = vrot.lane.b32.xlu0 %v467, 32
      %v1259 = vpop.permute.xlu0 %1258
      %1260 = vrot.lane.b32.xlu0 %v470, 32
      %v1261 = vpop.permute.xlu0 %1260
      %1262 = vrot.lane.b32.xlu0 %v472, 32
      %v1263 = vpop.permute.xlu0 %1262
      %1264 = vrot.lane.b32.xlu0 %v475, 32
      %v1265 = vpop.permute.xlu0 %1264
      %1266 = vrot.lane.b32.xlu0 %v477, 32
      %v1267 = vpop.permute.xlu0 %1266
      %1268 = vrot.lane.b32.xlu0 %v480, 32
      %v1269 = vpop.permute.xlu0 %1268
      %1270 = vrot.lane.b32.xlu0 %v482, 32
      %v1271 = vpop.permute.xlu0 %1270
      %1272 = vrot.lane.b32.xlu0 %v485, 32
      %v1273 = vpop.permute.xlu0 %1272
      %1274 = vrot.lane.b32.xlu0 %v487, 32
      %v1275 = vpop.permute.xlu0 %1274
      %1276 = vrot.lane.b32.xlu0 %v490, 32
      %v1277 = vpop.permute.xlu0 %1276
      %1278 = vrot.lane.b32.xlu0 %v492, 32
      %v1279 = vpop.permute.xlu0 %1278
      %1280 = vrot.lane.b32.xlu0 %v495, 32
      %v1281 = vpop.permute.xlu0 %1280
      %1282 = vrot.lane.b32.xlu0 %v497, 32
      %v1283 = vpop.permute.xlu0 %1282
      %1284 = vrot.lane.b32.xlu0 %v540, 32
      %v1285 = vpop.permute.xlu0 %1284
      %1286 = vrot.lane.b32.xlu0 %v542, 32
      %v1287 = vpop.permute.xlu0 %1286
      %1288 = vrot.lane.b32.xlu0 %v553, 32
      %v1289 = vpop.permute.xlu0 %1288
      %1290 = vrot.lane.b32.xlu0 %v555, 32
      %v1291 = vpop.permute.xlu0 %1290
      %vm1324 = vcmask 31744
      %v1325 = vsel %vm1324, %v234, %v557
      %v1326 = vsel %vm1324, %v235, %v559
      %v1327 = vsel %vm1324, %v237, %v561
      %v1328 = vsel %vm1324, %v238, %v563
      %v1329 = vsel %vm1324, %v240, %v565
      %v1330 = vsel %vm1324, %v241, %v567
      %v1331 = vsel %vm1324, %v243, %v569
      %v1332 = vsel %vm1324, %v244, %v571
      %v1333 = vsel %vm1324, %v246, %v573
      %v1334 = vsel %vm1324, %v247, %v575
      %v1335 = vsel %vm1324, %v249, %v577
      %v1336 = vsel %vm1324, %v250, %v579
      %v1337 = vsel %vm1324, %v252, %v581
      %v1338 = vsel %vm1324, %v253, %v583
      %v1339 = vsel %vm1324, %v255, %v585
      %v1340 = vsel %vm1324, %v256, %v587
      %v1341 = vsel %vm1324, %v258, %v589
      %v1342 = vsel %vm1324, %v259, %v591
      %v1343 = vsel %vm1324, %v261, %v593
      %v1344 = vsel %vm1324, %v262, %v595
      %v1345 = vsel %vm1324, %v264, %v597
      %v1346 = vsel %vm1324, %v265, %v599
      %v1347 = vsel %vm1324, %v267, %v601
      %v1348 = vsel %vm1324, %v268, %v603
      %v1349 = vsel %vm1324, %v270, %v605
      %v1350 = vsel %vm1324, %v271, %v607
      %v1351 = vsel %vm1324, %v273, %v609
      %v1352 = vsel %vm1324, %v274, %v611
      %v1353 = vsel %vm1324, %v276, %v613
      %v1354 = vsel %vm1324, %v277, %v615
      %v1355 = vsel %vm1324, %v279, %v617
      %v1356 = vsel %vm1324, %v280, %v619
      %vm1357 = vcmask 64512
      %v1358 = vsel %vm1357, %v1325, %v653
      %v1359 = vsel %vm1357, %v1326, %v655
      %v1360 = vsel %vm1357, %v1327, %v657
      %v1361 = vsel %vm1357, %v1328, %v659
      %v1362 = vsel %vm1357, %v1329, %v661
      %v1363 = vsel %vm1357, %v1330, %v663
      %v1364 = vsel %vm1357, %v1331, %v665
      %v1365 = vsel %vm1357, %v1332, %v667
      %v1366 = vsel %vm1357, %v1333, %v669
      %v1367 = vsel %vm1357, %v1334, %v671
      %v1368 = vsel %vm1357, %v1335, %v673
      %v1369 = vsel %vm1357, %v1336, %v675
      %v1370 = vsel %vm1357, %v1337, %v677
      %v1371 = vsel %vm1357, %v1338, %v679
      %v1372 = vsel %vm1357, %v1339, %v681
      %v1373 = vsel %vm1357, %v1340, %v683
      %v1374 = vsel %vm1357, %v1341, %v685
      %v1375 = vsel %vm1357, %v1342, %v687
      %v1376 = vsel %vm1357, %v1343, %v689
      %v1377 = vsel %vm1357, %v1344, %v691
      %v1378 = vsel %vm1357, %v1345, %v693
      %v1379 = vsel %vm1357, %v1346, %v695
      %v1380 = vsel %vm1357, %v1347, %v697
      %v1381 = vsel %vm1357, %v1348, %v699
      %v1382 = vsel %vm1357, %v1349, %v701
      %v1383 = vsel %vm1357, %v1350, %v703
      %v1384 = vsel %vm1357, %v1351, %v705
      %v1385 = vsel %vm1357, %v1352, %v707
      %v1386 = vsel %vm1357, %v1353, %v709
      %v1387 = vsel %vm1357, %v1354, %v711
      %v1388 = vsel %vm1357, %v1355, %v713
      %v1389 = vsel %vm1357, %v1356, %v715
      %vm1390 = vcmask 97280
      %v1391 = vsel %vm1390, %v1358, %v749
      %v1392 = vsel %vm1390, %v1359, %v751
      %v1393 = vsel %vm1390, %v1360, %v753
      %v1394 = vsel %vm1390, %v1361, %v755
      %v1395 = vsel %vm1390, %v1362, %v757
      %v1396 = vsel %vm1390, %v1363, %v759
      %v1397 = vsel %vm1390, %v1364, %v761
      %v1398 = vsel %vm1390, %v1365, %v763
      %v1399 = vsel %vm1390, %v1366, %v765
      %v1400 = vsel %vm1390, %v1367, %v767
      %v1401 = vsel %vm1390, %v1368, %v769
      %v1402 = vsel %vm1390, %v1369, %v771
      %v1403 = vsel %vm1390, %v1370, %v773
      %v1404 = vsel %vm1390, %v1371, %v775
      %v1405 = vsel %vm1390, %v1372, %v777
      %v1406 = vsel %vm1390, %v1373, %v779
      %v1407 = vsel %vm1390, %v1374, %v781
      %v1408 = vsel %vm1390, %v1375, %v783
      %v1409 = vsel %vm1390, %v1376, %v785
      %v1410 = vsel %vm1390, %v1377, %v787
      %v1411 = vsel %vm1390, %v1378, %v789
      %v1412 = vsel %vm1390, %v1379, %v791
      %v1413 = vsel %vm1390, %v1380, %v793
      %v1414 = vsel %vm1390, %v1381, %v795
      %v1415 = vsel %vm1390, %v1382, %v797
      %v1416 = vsel %vm1390, %v1383, %v799
      %v1417 = vsel %vm1390, %v1384, %v801
      %v1418 = vsel %vm1390, %v1385, %v803
      %v1419 = vsel %vm1390, %v1386, %v805
      %v1420 = vsel %vm1390, %v1387, %v807
      %v1421 = vsel %vm1390, %v1388, %v809
      %v1422 = vsel %vm1390, %v1389, %v811
      %vm1423 = vcmask 130048
      %v1424 = vsel %vm1423, %v1391, %v845
      %v1425 = vsel %vm1423, %v1392, %v847
      %v1426 = vsel %vm1423, %v1393, %v849
      %v1427 = vsel %vm1423, %v1394, %v851
      %v1428 = vsel %vm1423, %v1395, %v853
      %v1429 = vsel %vm1423, %v1396, %v855
      %v1430 = vsel %vm1423, %v1397, %v857
      %v1431 = vsel %vm1423, %v1398, %v859
      %v1432 = vsel %vm1423, %v1399, %v861
      %v1433 = vsel %vm1423, %v1400, %v863
      %v1434 = vsel %vm1423, %v1401, %v865
      %v1435 = vsel %vm1423, %v1402, %v867
      %v1436 = vsel %vm1423, %v1403, %v869
      %v1437 = vsel %vm1423, %v1404, %v871
      %v1438 = vsel %vm1423, %v1405, %v873
      %v1439 = vsel %vm1423, %v1406, %v875
      %v1440 = vsel %vm1423, %v1407, %v877
      %v1441 = vsel %vm1423, %v1408, %v879
      %v1442 = vsel %vm1423, %v1409, %v881
      %v1443 = vsel %vm1423, %v1410, %v883
      %v1444 = vsel %vm1423, %v1411, %v885
      %v1445 = vsel %vm1423, %v1412, %v887
      %v1446 = vsel %vm1423, %v1413, %v889
      %v1447 = vsel %vm1423, %v1414, %v891
      %v1448 = vsel %vm1423, %v1415, %v893
      %v1449 = vsel %vm1423, %v1416, %v895
      %v1450 = vsel %vm1423, %v1417, %v897
      %v1451 = vsel %vm1423, %v1418, %v899
      %v1452 = vsel %vm1423, %v1419, %v901
      %v1453 = vsel %vm1423, %v1420, %v903
      %v1454 = vsel %vm1423, %v1421, %v905
      %v1455 = vsel %vm1423, %v1422, %v907
      %vm1456 = vcmask 162816
      %v1457 = vsel %vm1456, %v1424, %v941
      %v1458 = vsel %vm1456, %v1425, %v943
      %v1459 = vsel %vm1456, %v1426, %v945
      %v1460 = vsel %vm1456, %v1427, %v947
      %v1461 = vsel %vm1456, %v1428, %v949
      %v1462 = vsel %vm1456, %v1429, %v951
      %v1463 = vsel %vm1456, %v1430, %v953
      %v1464 = vsel %vm1456, %v1431, %v955
      %v1465 = vsel %vm1456, %v1432, %v957
      %v1466 = vsel %vm1456, %v1433, %v959
      %v1467 = vsel %vm1456, %v1434, %v961
      %v1468 = vsel %vm1456, %v1435, %v963
      %v1469 = vsel %vm1456, %v1436, %v965
      %v1470 = vsel %vm1456, %v1437, %v967
      %v1471 = vsel %vm1456, %v1438, %v969
      %v1472 = vsel %vm1456, %v1439, %v971
      %v1473 = vsel %vm1456, %v1440, %v973
      %v1474 = vsel %vm1456, %v1441, %v975
      %v1475 = vsel %vm1456, %v1442, %v977
      %v1476 = vsel %vm1456, %v1443, %v979
      %v1477 = vsel %vm1456, %v1444, %v981
      %v1478 = vsel %vm1456, %v1445, %v983
      %v1479 = vsel %vm1456, %v1446, %v985
      %v1480 = vsel %vm1456, %v1447, %v987
      %v1481 = vsel %vm1456, %v1448, %v989
      %v1482 = vsel %vm1456, %v1449, %v991
      %v1483 = vsel %vm1456, %v1450, %v993
      %v1484 = vsel %vm1456, %v1451, %v995
      %v1485 = vsel %vm1456, %v1452, %v997
      %v1486 = vsel %vm1456, %v1453, %v999
      %v1487 = vsel %vm1456, %v1454, %v1001
      %v1488 = vsel %vm1456, %v1455, %v1003
      %vm1489 = vcmask 195584
      %v1490 = vsel %vm1489, %v1457, %v1037
      %v1491 = vsel %vm1489, %v1458, %v1039
      %v1492 = vsel %vm1489, %v1459, %v1041
      %v1493 = vsel %vm1489, %v1460, %v1043
      %v1494 = vsel %vm1489, %v1461, %v1045
      %v1495 = vsel %vm1489, %v1462, %v1047
      %v1496 = vsel %vm1489, %v1463, %v1049
      %v1497 = vsel %vm1489, %v1464, %v1051
      %v1498 = vsel %vm1489, %v1465, %v1053
      %v1499 = vsel %vm1489, %v1466, %v1055
      %v1500 = vsel %vm1489, %v1467, %v1057
      %v1501 = vsel %vm1489, %v1468, %v1059
      %v1502 = vsel %vm1489, %v1469, %v1061
      %v1503 = vsel %vm1489, %v1470, %v1063
      %v1504 = vsel %vm1489, %v1471, %v1065
      %v1505 = vsel %vm1489, %v1472, %v1067
      %v1506 = vsel %vm1489, %v1473, %v1069
      %v1507 = vsel %vm1489, %v1474, %v1071
      %v1508 = vsel %vm1489, %v1475, %v1073
      %v1509 = vsel %vm1489, %v1476, %v1075
      %v1510 = vsel %vm1489, %v1477, %v1077
      %v1511 = vsel %vm1489, %v1478, %v1079
      %v1512 = vsel %vm1489, %v1479, %v1081
      %v1513 = vsel %vm1489, %v1480, %v1083
      %v1514 = vsel %vm1489, %v1481, %v1085
      %v1515 = vsel %vm1489, %v1482, %v1087
      %v1516 = vsel %vm1489, %v1483, %v1089
      %v1517 = vsel %vm1489, %v1484, %v1091
      %v1518 = vsel %vm1489, %v1485, %v1093
      %v1519 = vsel %vm1489, %v1486, %v1095
      %v1520 = vsel %vm1489, %v1487, %v1097
      %v1521 = vsel %vm1489, %v1488, %v1099
      %vm1522 = vcmask 228352
      %v1523 = vsel %vm1522, %v1490, %v1133
      %v1524 = vsel %vm1522, %v1491, %v1135
      %v1525 = vsel %vm1522, %v1492, %v1137
      %v1526 = vsel %vm1522, %v1493, %v1139
      %v1527 = vsel %vm1522, %v1494, %v1141
      %v1528 = vsel %vm1522, %v1495, %v1143
      %v1529 = vsel %vm1522, %v1496, %v1145
      %v1530 = vsel %vm1522, %v1497, %v1147
      %v1531 = vsel %vm1522, %v1498, %v1149
      %v1532 = vsel %vm1522, %v1499, %v1151
      %v1533 = vsel %vm1522, %v1500, %v1153
      %v1534 = vsel %vm1522, %v1501, %v1155
      %v1535 = vsel %vm1522, %v1502, %v1157
      %v1536 = vsel %vm1522, %v1503, %v1159
      %v1537 = vsel %vm1522, %v1504, %v1161
      %v1538 = vsel %vm1522, %v1505, %v1163
      %v1539 = vsel %vm1522, %v1506, %v1165
      %v1540 = vsel %vm1522, %v1507, %v1167
      %v1541 = vsel %vm1522, %v1508, %v1169
      %v1542 = vsel %vm1522, %v1509, %v1171
      %v1543 = vsel %vm1522, %v1510, %v1173
      %v1544 = vsel %vm1522, %v1511, %v1175
      %v1545 = vsel %vm1522, %v1512, %v1177
      %v1546 = vsel %vm1522, %v1513, %v1179
      %v1547 = vsel %vm1522, %v1514, %v1181
      %v1548 = vsel %vm1522, %v1515, %v1183
      %v1549 = vsel %vm1522, %v1516, %v1185
      %v1550 = vsel %vm1522, %v1517, %v1187
      %v1551 = vsel %vm1522, %v1518, %v1189
      %v1552 = vsel %vm1522, %v1519, %v1191
      %v1553 = vsel %vm1522, %v1520, %v1193
      %v1554 = vsel %vm1522, %v1521, %v1195
      %vm1555 = vcmask 261120
      %v1556 = vsel %vm1555, %v1523, %v1229
      %v1557 = vsel %vm1555, %v1524, %v1231
      %v1558 = vsel %vm1555, %v1525, %v1233
      %v1559 = vsel %vm1555, %v1526, %v1235
      %v1560 = vsel %vm1555, %v1527, %v1237
      %v1561 = vsel %vm1555, %v1528, %v1239
      %v1562 = vsel %vm1555, %v1529, %v1241
      %v1563 = vsel %vm1555, %v1530, %v1243
      %v1564 = vsel %vm1555, %v1531, %v1245
      %v1565 = vsel %vm1555, %v1532, %v1247
      %v1566 = vsel %vm1555, %v1533, %v1249
      %v1567 = vsel %vm1555, %v1534, %v1251
      %v1568 = vsel %vm1555, %v1535, %v1253
      %v1569 = vsel %vm1555, %v1536, %v1255
      %v1570 = vsel %vm1555, %v1537, %v1257
      %v1571 = vsel %vm1555, %v1538, %v1259
      %v1572 = vsel %vm1555, %v1539, %v1261
      %v1573 = vsel %vm1555, %v1540, %v1263
      %v1574 = vsel %vm1555, %v1541, %v1265
      %v1575 = vsel %vm1555, %v1542, %v1267
      %v1576 = vsel %vm1555, %v1543, %v1269
      %v1577 = vsel %vm1555, %v1544, %v1271
      %v1578 = vsel %vm1555, %v1545, %v1273
      %v1579 = vsel %vm1555, %v1546, %v1275
      %v1580 = vsel %vm1555, %v1547, %v1277
      %v1581 = vsel %vm1555, %v1548, %v1279
      %v1582 = vsel %vm1555, %v1549, %v1281
      %v1583 = vsel %vm1555, %v1550, %v1283
      %v1584 = vsel %vm1555, %v1551, %v1285
      %v1585 = vsel %vm1555, %v1552, %v1287
      %v1586 = vsel %vm1555, %v1553, %v1289
      %v1587 = vsel %vm1555, %v1554, %v1291
      %v1588 = vld [vmem:[%s1] sm:$0xff]
      %v1589 = vld [vmem:[%s1 + $0x8] sm:$0xff]
      %v1590 = vld [vmem:[%s1 + $0x10] sm:$0xff]
      %v1591 = vld [vmem:[%s1 + $0x18] sm:$0xff]
      %v1592 = vld [vmem:[%s1 + $0x20] sm:$0xf]
      %vm1593 = vcmask 293888
      %v1595 = vsel %vm1593, %v1556, 0
      %v1598 = vsel %vm1593, %v1557, 0
      %v1601 = vsel %vm1593, %v1558, 0
      %v1604 = vsel %vm1593, %v1559, 0
      %v1607 = vsel %vm1593, %v1560, 0
      %v1610 = vsel %vm1593, %v1561, 0
      %v1613 = vsel %vm1593, %v1562, 0
      %v1616 = vsel %vm1593, %v1563, 0
      %v1619 = vsel %vm1593, %v1564, 0
      %v1622 = vsel %vm1593, %v1565, 0
      %v1625 = vsel %vm1593, %v1566, 0
      %v1628 = vsel %vm1593, %v1567, 0
      %v1631 = vsel %vm1593, %v1568, 0
      %v1634 = vsel %vm1593, %v1569, 0
      %v1637 = vsel %vm1593, %v1570, 0
      %v1640 = vsel %vm1593, %v1571, 0
      %v1643 = vsel %vm1593, %v1572, 0
      %v1646 = vsel %vm1593, %v1573, 0
      %v1649 = vsel %vm1593, %v1574, 0
      %v1652 = vsel %vm1593, %v1575, 0
      %v1655 = vsel %vm1593, %v1576, 0
      %v1658 = vsel %vm1593, %v1577, 0
      %v1661 = vsel %vm1593, %v1578, 0
      %v1664 = vsel %vm1593, %v1579, 0
      %v1667 = vsel %vm1593, %v1580, 0
      %v1670 = vsel %vm1593, %v1581, 0
      %v1673 = vsel %vm1593, %v1582, 0
      %v1676 = vsel %vm1593, %v1583, 0
      %v1679 = vsel %vm1593, %v1584, 0
      %v1682 = vsel %vm1593, %v1585, 0
      %v1685 = vsel %vm1593, %v1586, 0
      %v1688 = vsel %vm1593, %v1587, 0
      %vm1690 = vcmask 1043456
      %v1692 = vsel %vm1690, %v1592, 0
      %1694 = vmatprep.subr.mxu0 0.0
      %1695 = vmatpush1.msra.mxu0 0.0
      %1696 = vmatprep.subr.mxu0 0.0
      %1697 = vmatpush1.msra.mxu0 0.0
      %1698 = vmatprep.subr.mxu0 0.0
      %1699 = vmatpush1.msra.mxu0 0.0
      %1700 = vmatprep.subr.mxu0 0.0
      %1701 = vmatpush1.msra.mxu0 0.0
      %1702 = vmatprep.subr.mxu0 0.0
      %1703 = vmatpush1.msra.mxu0 0.0
      %1704 = vmatprep.subr.mxu0 0.0
      %1705 = vmatpush1.msra.mxu0 0.0
      %1706 = vmatprep.subr.mxu0 0.0
      %1707 = vmatpush1.msra.mxu0 0.0
      %1708 = vmatprep.subr.mxu0 0.0
      %1709 = vmatpush1.msra.mxu0 0.0
      %1710 = vmatprep.subr.mxu0 0.0
      %1711 = vmatpush1.msra.mxu0 0.0
      %1712 = vmatprep.subr.mxu0 0.0
      %1713 = vmatpush1.msra.mxu0 0.0
      %1714 = vmatprep.subr.mxu0 0.0
      %1715 = vmatpush1.msra.mxu0 0.0
      %1716 = vmatprep.subr.mxu0 0.0
      %1717 = vmatpush1.msra.mxu0 %v1692
      %1718 = vmatprep.subr.mxu0 0.0
      %1719 = vmatpush1.msra.mxu0 %v1591
      %1720 = vmatprep.subr.mxu0 0.0
      %1721 = vmatpush1.msra.mxu0 %v1590
      %1722 = vmatprep.subr.mxu0 0.0
      %1723 = vmatpush1.msra.mxu0 %v1589
      %1724 = vmatprep.subr.mxu0 0.0
      %1725 = vmatpush1.msra.mxu0 %v1588
      %1726 = vmatprep.subr.mxu0 0.0
      %1727 = vmatpush2.msra.mxu0 0.0
      %1728 = vmatprep.subr.mxu0 0.0
      %1729 = vmatpush2.msra.mxu0 0.0
      %1730 = vmatprep.subr.mxu0 0.0
      %1731 = vmatpush2.msra.mxu0 0.0
      %1732 = vmatprep.subr.mxu0 0.0
      %1733 = vmatpush2.msra.mxu0 0.0
      %1734 = vmatprep.subr.mxu0 0.0
      %1735 = vmatpush2.msra.mxu0 0.0
      %1736 = vmatprep.subr.mxu0 0.0
      %1737 = vmatpush2.msra.mxu0 0.0
      %1738 = vmatprep.subr.mxu0 0.0
      %1739 = vmatpush2.msra.mxu0 0.0
      %1740 = vmatprep.subr.mxu0 0.0
      %1741 = vmatpush2.msra.mxu0 0.0
      %1742 = vmatprep.subr.mxu0 0.0
      %1743 = vmatpush2.msra.mxu0 0.0
      %1744 = vmatprep.subr.mxu0 0.0
      %1745 = vmatpush2.msra.mxu0 0.0
      %1746 = vmatprep.subr.mxu0 0.0
      %1747 = vmatpush2.msra.mxu0 0.0
      %1748 = vmatprep.subr.mxu0 0.0
      %1749 = vmatpush2.msra.mxu0 0.0
      %1750 = vmatprep.subr.mxu0 0.0
      %1751 = vmatpush2.msra.mxu0 0.0
      %1752 = vmatprep.subr.mxu0 0.0
      %1753 = vmatpush2.msra.mxu0 0.0
      %1754 = vmatprep.subr.mxu0 0.0
      %1755 = vmatpush2.msra.mxu0 0.0
      %1756 = vmatprep.subr.mxu0 0.0
      %1757 = vmatpush2.msra.mxu0 0.0
      %1758 = vmatprep.mubr.f32.mxu0 0.0
      %1759 = vmatmul.mubr.f32.gmra.mxu0 %v1595
      %v1760 = vpop.f32.mrf.mxu0
      %v1761 = vadd.f32 0.0, %v1760
      %v1762 = vpop.f32.mrf.mxu0
      %1763 = vmatprep.mubr.f32.mxu0 0.0
      %1764 = vmatmul.mubr.f32.gmra.mxu0 %v1598
      %v1765 = vpop.f32.mrf.mxu0
      %v1766 = vadd.f32 0.0, %v1765
      %v1767 = vpop.f32.mrf.mxu0
      %1768 = vmatprep.mubr.f32.mxu0 0.0
      %1769 = vmatmul.mubr.f32.gmra.mxu0 %v1601
      %v1770 = vpop.f32.mrf.mxu0
      %v1771 = vadd.f32 0.0, %v1770
      %v1772 = vpop.f32.mrf.mxu0
      %1773 = vmatprep.mubr.f32.mxu0 0.0
      %1774 = vmatmul.mubr.f32.gmra.mxu0 %v1604
      %v1775 = vpop.f32.mrf.mxu0
      %v1776 = vadd.f32 0.0, %v1775
      %v1777 = vpop.f32.mrf.mxu0
      %1778 = vmatprep.mubr.f32.mxu0 0.0
      %1779 = vmatmul.mubr.f32.gmra.mxu0 %v1607
      %v1780 = vpop.f32.mrf.mxu0
      %v1781 = vadd.f32 0.0, %v1780
      %v1782 = vpop.f32.mrf.mxu0
      %1783 = vmatprep.mubr.f32.mxu0 0.0
      %1784 = vmatmul.mubr.f32.gmra.mxu0 %v1610
      %v1785 = vpop.f32.mrf.mxu0
      %v1786 = vadd.f32 0.0, %v1785
      %v1787 = vpop.f32.mrf.mxu0
      %1788 = vmatprep.mubr.f32.mxu0 0.0
      %1789 = vmatmul.mubr.f32.gmra.mxu0 %v1613
      %v1790 = vpop.f32.mrf.mxu0
      %v1791 = vadd.f32 0.0, %v1790
      %v1792 = vpop.f32.mrf.mxu0
      %1793 = vmatprep.mubr.f32.mxu0 0.0
      %1794 = vmatmul.mubr.f32.gmra.mxu0 %v1616
      %v1795 = vpop.f32.mrf.mxu0
      %v1796 = vadd.f32 0.0, %v1795
      %v1797 = vpop.f32.mrf.mxu0
      %1798 = vmatprep.mubr.f32.mxu0 0.0
      %1799 = vmatmul.mubr.f32.gmra.mxu0 %v1619
      %v1800 = vpop.f32.mrf.mxu0
      %v1801 = vadd.f32 0.0, %v1800
      %v1802 = vpop.f32.mrf.mxu0
      %1803 = vmatprep.mubr.f32.mxu0 0.0
      %1804 = vmatmul.mubr.f32.gmra.mxu0 %v1622
      %v1805 = vpop.f32.mrf.mxu0
      %v1806 = vadd.f32 0.0, %v1805
      %v1807 = vpop.f32.mrf.mxu0
      %1808 = vmatprep.mubr.f32.mxu0 0.0
      %1809 = vmatmul.mubr.f32.gmra.mxu0 %v1625
      %v1810 = vpop.f32.mrf.mxu0
      %v1811 = vadd.f32 0.0, %v1810
      %v1812 = vpop.f32.mrf.mxu0
      %1813 = vmatprep.mubr.f32.mxu0 0.0
      %1814 = vmatmul.mubr.f32.gmra.mxu0 %v1628
      %v1815 = vpop.f32.mrf.mxu0
      %v1816 = vadd.f32 0.0, %v1815
      %v1817 = vpop.f32.mrf.mxu0
      %1818 = vmatprep.mubr.f32.mxu0 0.0
      %1819 = vmatmul.mubr.f32.gmra.mxu0 %v1631
      %v1820 = vpop.f32.mrf.mxu0
      %v1821 = vadd.f32 0.0, %v1820
      %v1822 = vpop.f32.mrf.mxu0
      %1823 = vmatprep.mubr.f32.mxu0 0.0
      %1824 = vmatmul.mubr.f32.gmra.mxu0 %v1634
      %v1825 = vpop.f32.mrf.mxu0
      %v1826 = vadd.f32 0.0, %v1825
      %v1827 = vpop.f32.mrf.mxu0
      %1828 = vmatprep.mubr.f32.mxu0 0.0
      %1829 = vmatmul.mubr.f32.gmra.mxu0 %v1637
      %v1830 = vpop.f32.mrf.mxu0
      %v1831 = vadd.f32 0.0, %v1830
      %v1832 = vpop.f32.mrf.mxu0
      %1833 = vmatprep.mubr.f32.mxu0 0.0
      %1834 = vmatmul.mubr.f32.gmra.mxu0 %v1640
      %v1835 = vpop.f32.mrf.mxu0
      %v1836 = vadd.f32 0.0, %v1835
      %v1837 = vpop.f32.mrf.mxu0
      %1838 = vmatprep.mubr.f32.mxu0 0.0
      %1839 = vmatmul.mubr.f32.gmra.mxu0 %v1643
      %v1840 = vpop.f32.mrf.mxu0
      %v1841 = vadd.f32 0.0, %v1840
      %v1842 = vpop.f32.mrf.mxu0
      %1843 = vmatprep.mubr.f32.mxu0 0.0
      %1844 = vmatmul.mubr.f32.gmra.mxu0 %v1646
      %v1845 = vpop.f32.mrf.mxu0
      %v1846 = vadd.f32 0.0, %v1845
      %v1847 = vpop.f32.mrf.mxu0
      %1848 = vmatprep.mubr.f32.mxu0 0.0
      %1849 = vmatmul.mubr.f32.gmra.mxu0 %v1649
      %v1850 = vpop.f32.mrf.mxu0
      %v1851 = vadd.f32 0.0, %v1850
      %v1852 = vpop.f32.mrf.mxu0
      %1853 = vmatprep.mubr.f32.mxu0 0.0
      %1854 = vmatmul.mubr.f32.gmra.mxu0 %v1652
      %v1855 = vpop.f32.mrf.mxu0
      %v1856 = vadd.f32 0.0, %v1855
      %v1857 = vpop.f32.mrf.mxu0
      %1858 = vmatprep.mubr.f32.mxu0 0.0
      %1859 = vmatmul.mubr.f32.gmra.mxu0 %v1655
      %v1860 = vpop.f32.mrf.mxu0
      %v1861 = vadd.f32 0.0, %v1860
      %v1862 = vpop.f32.mrf.mxu0
      %1863 = vmatprep.mubr.f32.mxu0 0.0
      %1864 = vmatmul.mubr.f32.gmra.mxu0 %v1658
      %v1865 = vpop.f32.mrf.mxu0
      %v1866 = vadd.f32 0.0, %v1865
      %v1867 = vpop.f32.mrf.mxu0
      %1868 = vmatprep.mubr.f32.mxu0 0.0
      %1869 = vmatmul.mubr.f32.gmra.mxu0 %v1661
      %v1870 = vpop.f32.mrf.mxu0
      %v1871 = vadd.f32 0.0, %v1870
      %v1872 = vpop.f32.mrf.mxu0
      %1873 = vmatprep.mubr.f32.mxu0 0.0
      %1874 = vmatmul.mubr.f32.gmra.mxu0 %v1664
      %v1875 = vpop.f32.mrf.mxu0
      %v1876 = vadd.f32 0.0, %v1875
      %v1877 = vpop.f32.mrf.mxu0
      %1878 = vmatprep.mubr.f32.mxu0 0.0
      %1879 = vmatmul.mubr.f32.gmra.mxu0 %v1667
      %v1880 = vpop.f32.mrf.mxu0
      %v1881 = vadd.f32 0.0, %v1880
      %v1882 = vpop.f32.mrf.mxu0
      %1883 = vmatprep.mubr.f32.mxu0 0.0
      %1884 = vmatmul.mubr.f32.gmra.mxu0 %v1670
      %v1885 = vpop.f32.mrf.mxu0
      %v1886 = vadd.f32 0.0, %v1885
      %v1887 = vpop.f32.mrf.mxu0
      %1888 = vmatprep.mubr.f32.mxu0 0.0
      %1889 = vmatmul.mubr.f32.gmra.mxu0 %v1673
      %v1890 = vpop.f32.mrf.mxu0
      %v1891 = vadd.f32 0.0, %v1890
      %v1892 = vpop.f32.mrf.mxu0
      %1893 = vmatprep.mubr.f32.mxu0 0.0
      %1894 = vmatmul.mubr.f32.gmra.mxu0 %v1676
      %v1895 = vpop.f32.mrf.mxu0
      %v1896 = vadd.f32 0.0, %v1895
      %v1897 = vpop.f32.mrf.mxu0
      %1898 = vmatprep.mubr.f32.mxu0 0.0
      %1899 = vmatmul.mubr.f32.gmra.mxu0 %v1679
      %v1900 = vpop.f32.mrf.mxu0
      %v1901 = vadd.f32 0.0, %v1900
      %v1902 = vpop.f32.mrf.mxu0
      %1903 = vmatprep.mubr.f32.mxu0 0.0
      %1904 = vmatmul.mubr.f32.gmra.mxu0 %v1682
      %v1905 = vpop.f32.mrf.mxu0
      %v1906 = vadd.f32 0.0, %v1905
      %v1907 = vpop.f32.mrf.mxu0
      %1908 = vmatprep.mubr.f32.mxu0 0.0
      %1909 = vmatmul.mubr.f32.gmra.mxu0 %v1685
      %v1910 = vpop.f32.mrf.mxu0
      %v1911 = vadd.f32 0.0, %v1910
      %v1912 = vpop.f32.mrf.mxu0
      %1913 = vmatprep.mubr.f32.mxu0 0.0
      %1914 = vmatmul.mubr.f32.gmra.mxu0 %v1688
      %v1915 = vpop.f32.mrf.mxu0
      %v1916 = vadd.f32 0.0, %v1915
      %v1917 = vpop.f32.mrf.mxu0
      %1918 = vdwg.mxu0
      %v1919 = vld [vmem:[%s2] sm:$0x1]
      %v1921 = vlaneseq
      %v1922 = vshrl.u32 %v1921, 7
      %v1923 = vsub.s32 0, %v1922
      %v1924 = vrot.slane %v1919, %v1923
      %v1926 = vmul.f32 %v1761, %v1924
      %v1927 = vmul.f32 %v1766, %v1924
      %v1928 = vmul.f32 %v1771, %v1924
      %v1929 = vmul.f32 %v1776, %v1924
      %v1930 = vmul.f32 %v1781, %v1924
      %v1931 = vmul.f32 %v1786, %v1924
      %v1932 = vmul.f32 %v1791, %v1924
      %v1933 = vmul.f32 %v1796, %v1924
      %v1934 = vmul.f32 %v1801, %v1924
      %v1935 = vmul.f32 %v1806, %v1924
      %v1936 = vmul.f32 %v1811, %v1924
      %v1937 = vmul.f32 %v1816, %v1924
      %v1938 = vmul.f32 %v1821, %v1924
      %v1939 = vmul.f32 %v1826, %v1924
      %v1940 = vmul.f32 %v1831, %v1924
      %v1941 = vmul.f32 %v1836, %v1924
      %v1942 = vmul.f32 %v1841, %v1924
      %v1943 = vmul.f32 %v1846, %v1924
      %v1944 = vmul.f32 %v1851, %v1924
      %v1945 = vmul.f32 %v1856, %v1924
      %v1946 = vmul.f32 %v1861, %v1924
      %v1947 = vmul.f32 %v1866, %v1924
      %v1948 = vmul.f32 %v1871, %v1924
      %v1949 = vmul.f32 %v1876, %v1924
      %v1950 = vmul.f32 %v1881, %v1924
      %v1951 = vmul.f32 %v1886, %v1924
      %v1952 = vmul.f32 %v1891, %v1924
      %v1953 = vmul.f32 %v1896, %v1924
      %v1954 = vmul.f32 %v1901, %v1924
      %v1955 = vmul.f32 %v1906, %v1924
      %v1956 = vmul.f32 %v1911, %v1924
      %v1957 = vmul.f32 %v1916, %v1924
      %v1958 = vld [vmem:[%s3] sm:$0x1]
      %v1960 = vlaneseq
      %v1961 = vshrl.u32 %v1960, 7
      %v1962 = vsub.s32 0, %v1961
      %v1963 = vrot.slane %v1958, %v1962
      %v1965 = vadd.f32 %v1926, %v1963
      %v1966 = vadd.f32 %v1927, %v1963
      %v1967 = vadd.f32 %v1928, %v1963
      %v1968 = vadd.f32 %v1929, %v1963
      %v1969 = vadd.f32 %v1930, %v1963
      %v1970 = vadd.f32 %v1931, %v1963
      %v1971 = vadd.f32 %v1932, %v1963
      %v1972 = vadd.f32 %v1933, %v1963
      %v1973 = vadd.f32 %v1934, %v1963
      %v1974 = vadd.f32 %v1935, %v1963
      %v1975 = vadd.f32 %v1936, %v1963
      %v1976 = vadd.f32 %v1937, %v1963
      %v1977 = vadd.f32 %v1938, %v1963
      %v1978 = vadd.f32 %v1939, %v1963
      %v1979 = vadd.f32 %v1940, %v1963
      %v1980 = vadd.f32 %v1941, %v1963
      %v1981 = vadd.f32 %v1942, %v1963
      %v1982 = vadd.f32 %v1943, %v1963
      %v1983 = vadd.f32 %v1944, %v1963
      %v1984 = vadd.f32 %v1945, %v1963
      %v1985 = vadd.f32 %v1946, %v1963
      %v1986 = vadd.f32 %v1947, %v1963
      %v1987 = vadd.f32 %v1948, %v1963
      %v1988 = vadd.f32 %v1949, %v1963
      %v1989 = vadd.f32 %v1950, %v1963
      %v1990 = vadd.f32 %v1951, %v1963
      %v1991 = vadd.f32 %v1952, %v1963
      %v1992 = vadd.f32 %v1953, %v1963
      %v1993 = vadd.f32 %v1954, %v1963
      %v1994 = vadd.f32 %v1955, %v1963
      %v1995 = vadd.f32 %v1956, %v1963
      %v1996 = vadd.f32 %v1957, %v1963
      %vm1997 = vcmp.gt.f32.partialorder %v1965, 0.0
      %vm1998 = vcmp.gt.f32.partialorder %v1966, 0.0
      %vm1999 = vcmp.gt.f32.partialorder %v1967, 0.0
      %vm2000 = vcmp.gt.f32.partialorder %v1968, 0.0
      %vm2001 = vcmp.gt.f32.partialorder %v1969, 0.0
      %vm2002 = vcmp.gt.f32.partialorder %v1970, 0.0
      %vm2003 = vcmp.gt.f32.partialorder %v1971, 0.0
      %vm2004 = vcmp.gt.f32.partialorder %v1972, 0.0
      %vm2005 = vcmp.gt.f32.partialorder %v1973, 0.0
      %vm2006 = vcmp.gt.f32.partialorder %v1974, 0.0
      %vm2007 = vcmp.gt.f32.partialorder %v1975, 0.0
      %vm2008 = vcmp.gt.f32.partialorder %v1976, 0.0
      %vm2009 = vcmp.gt.f32.partialorder %v1977, 0.0
      %vm2010 = vcmp.gt.f32.partialorder %v1978, 0.0
      %vm2011 = vcmp.gt.f32.partialorder %v1979, 0.0
      %vm2012 = vcmp.gt.f32.partialorder %v1980, 0.0
      %vm2013 = vcmp.gt.f32.partialorder %v1981, 0.0
      %vm2014 = vcmp.gt.f32.partialorder %v1982, 0.0
      %vm2015 = vcmp.gt.f32.partialorder %v1983, 0.0
      %vm2016 = vcmp.gt.f32.partialorder %v1984, 0.0
      %vm2017 = vcmp.gt.f32.partialorder %v1985, 0.0
      %vm2018 = vcmp.gt.f32.partialorder %v1986, 0.0
      %vm2019 = vcmp.gt.f32.partialorder %v1987, 0.0
      %vm2020 = vcmp.gt.f32.partialorder %v1988, 0.0
      %vm2021 = vcmp.gt.f32.partialorder %v1989, 0.0
      %vm2022 = vcmp.gt.f32.partialorder %v1990, 0.0
      %vm2023 = vcmp.gt.f32.partialorder %v1991, 0.0
      %vm2024 = vcmp.gt.f32.partialorder %v1992, 0.0
      %vm2025 = vcmp.gt.f32.partialorder %v1993, 0.0
      %vm2026 = vcmp.gt.f32.partialorder %v1994, 0.0
      %vm2027 = vcmp.gt.f32.partialorder %v1995, 0.0
      %vm2028 = vcmp.gt.f32.partialorder %v1996, 0.0
      %v2029 = vmul.f32 %v1965, 0.1
      %v2030 = vmul.f32 %v1966, 0.1
      %v2031 = vmul.f32 %v1967, 0.1
      %v2032 = vmul.f32 %v1968, 0.1
      %v2033 = vmul.f32 %v1969, 0.1
      %v2034 = vmul.f32 %v1970, 0.1
      %v2035 = vmul.f32 %v1971, 0.1
      %v2036 = vmul.f32 %v1972, 0.1
      %v2037 = vmul.f32 %v1973, 0.1
      %v2038 = vmul.f32 %v1974, 0.1
      %v2039 = vmul.f32 %v1975, 0.1
      %v2040 = vmul.f32 %v1976, 0.1
      %v2041 = vmul.f32 %v1977, 0.1
      %v2042 = vmul.f32 %v1978, 0.1
      %v2043 = vmul.f32 %v1979, 0.1
      %v2044 = vmul.f32 %v1980, 0.1
      %v2045 = vmul.f32 %v1981, 0.1
      %v2046 = vmul.f32 %v1982, 0.1
      %v2047 = vmul.f32 %v1983, 0.1
      %v2048 = vmul.f32 %v1984, 0.1
      %v2049 = vmul.f32 %v1985, 0.1
      %v2050 = vmul.f32 %v1986, 0.1
      %v2051 = vmul.f32 %v1987, 0.1
      %v2052 = vmul.f32 %v1988, 0.1
      %v2053 = vmul.f32 %v1989, 0.1
      %v2054 = vmul.f32 %v1990, 0.1
      %v2055 = vmul.f32 %v1991, 0.1
      %v2056 = vmul.f32 %v1992, 0.1
      %v2057 = vmul.f32 %v1993, 0.1
      %v2058 = vmul.f32 %v1994, 0.1
      %v2059 = vmul.f32 %v1995, 0.1
      %v2060 = vmul.f32 %v1996, 0.1
      %v2061 = vsel %vm1997, %v1965, %v2029
      %v2062 = vsel %vm1998, %v1966, %v2030
      %v2063 = vsel %vm1999, %v1967, %v2031
      %v2064 = vsel %vm2000, %v1968, %v2032
      %v2065 = vsel %vm2001, %v1969, %v2033
      %v2066 = vsel %vm2002, %v1970, %v2034
      %v2067 = vsel %vm2003, %v1971, %v2035
      %v2068 = vsel %vm2004, %v1972, %v2036
      %v2069 = vsel %vm2005, %v1973, %v2037
      %v2070 = vsel %vm2006, %v1974, %v2038
      %v2071 = vsel %vm2007, %v1975, %v2039
      %v2072 = vsel %vm2008, %v1976, %v2040
      %v2073 = vsel %vm2009, %v1977, %v2041
      %v2074 = vsel %vm2010, %v1978, %v2042
      %v2075 = vsel %vm2011, %v1979, %v2043
      %v2076 = vsel %vm2012, %v1980, %v2044
      %v2077 = vsel %vm2013, %v1981, %v2045
      %v2078 = vsel %vm2014, %v1982, %v2046
      %v2079 = vsel %vm2015, %v1983, %v2047
      %v2080 = vsel %vm2016, %v1984, %v2048
      %v2081 = vsel %vm2017, %v1985, %v2049
      %v2082 = vsel %vm2018, %v1986, %v2050
      %v2083 = vsel %vm2019, %v1987, %v2051
      %v2084 = vsel %vm2020, %v1988, %v2052
      %v2085 = vsel %vm2021, %v1989, %v2053
      %v2086 = vsel %vm2022, %v1990, %v2054
      %v2087 = vsel %vm2023, %v1991, %v2055
      %v2088 = vsel %vm2024, %v1992, %v2056
      %v2089 = vsel %vm2025, %v1993, %v2057
      %v2090 = vsel %vm2026, %v1994, %v2058
      %v2091 = vsel %vm2027, %v1995, %v2059
      %v2092 = vsel %vm2028, %v1996, %v2060
      %v2093 = vadd.f32 %v344, %v2061
      %v2094 = vadd.f32 %v346, %v2062
      %v2095 = vadd.f32 %v349, %v2063
      %v2096 = vadd.f32 %v351, %v2064
      %v2097 = vadd.f32 %v354, %v2065
      %v2098 = vadd.f32 %v356, %v2066
      %v2099 = vadd.f32 %v359, %v2067
      %v2100 = vadd.f32 %v361, %v2068
      %v2101 = vadd.f32 %v364, %v2069
      %v2102 = vadd.f32 %v366, %v2070
      %v2103 = vadd.f32 %v369, %v2071
      %v2104 = vadd.f32 %v371, %v2072
      %v2105 = vadd.f32 %v374, %v2073
      %v2106 = vadd.f32 %v376, %v2074
      %v2107 = vadd.f32 %v379, %v2075
      %v2108 = vadd.f32 %v381, %v2076
      %v2109 = vadd.f32 %v384, %v2077
      %v2110 = vadd.f32 %v386, %v2078
      %v2111 = vadd.f32 %v389, %v2079
      %v2112 = vadd.f32 %v391, %v2080
      %v2113 = vadd.f32 %v394, %v2081
      %v2114 = vadd.f32 %v396, %v2082
      %v2115 = vadd.f32 %v399, %v2083
      %v2116 = vadd.f32 %v401, %v2084
      %v2117 = vadd.f32 %v404, %v2085
      %v2118 = vadd.f32 %v406, %v2086
      %v2119 = vadd.f32 %v409, %v2087
      %v2120 = vadd.f32 %v411, %v2088
      %v2121 = vadd.f32 %v414, %v2089
      %v2122 = vadd.f32 %v416, %v2090
      %v2123 = vadd.f32 %v503, %v2091
      %v2124 = vadd.f32 %v505, %v2092
      %2125 = vst.msk [vmem:[%s233] sm:$0xff] %vm1324, %v2093
      %2126 = vst.msk [vmem:[%s233 + $0x8] sm:$0xff] %vm1324, %v2094
      %2127 = vst.msk [vmem:[%s233 + $0x10] sm:$0xff] %vm1324, %v2095
      %2128 = vst.msk [vmem:[%s233 + $0x18] sm:$0xff] %vm1324, %v2096
      %2129 = vst.msk [vmem:[%s233 + $0x20] sm:$0xff] %vm1324, %v2097
      %2130 = vst.msk [vmem:[%s233 + $0x28] sm:$0xff] %vm1324, %v2098
      %2131 = vst.msk [vmem:[%s233 + $0x30] sm:$0xff] %vm1324, %v2099
      %2132 = vst.msk [vmem:[%s233 + $0x38] sm:$0xff] %vm1324, %v2100
      %2133 = vst.msk [vmem:[%s233 + $0x40] sm:$0xff] %vm1324, %v2101
      %2134 = vst.msk [vmem:[%s233 + $0x48] sm:$0xff] %vm1324, %v2102
      %2135 = vst.msk [vmem:[%s233 + $0x50] sm:$0xff] %vm1324, %v2103
      %2136 = vst.msk [vmem:[%s233 + $0x58] sm:$0xff] %vm1324, %v2104
      %2137 = vst.msk [vmem:[%s233 + $0x60] sm:$0xff] %vm1324, %v2105
      %2138 = vst.msk [vmem:[%s233 + $0x68] sm:$0xff] %vm1324, %v2106
      %2139 = vst.msk [vmem:[%s233 + $0x70] sm:$0xff] %vm1324, %v2107
      %2140 = vst.msk [vmem:[%s233 + $0x78] sm:$0xff] %vm1324, %v2108
      %2141 = vst.msk [vmem:[%s233 + $0x80] sm:$0xff] %vm1324, %v2109
      %2142 = vst.msk [vmem:[%s233 + $0x88] sm:$0xff] %vm1324, %v2110
      %2143 = vst.msk [vmem:[%s233 + $0x90] sm:$0xff] %vm1324, %v2111
      %2144 = vst.msk [vmem:[%s233 + $0x98] sm:$0xff] %vm1324, %v2112
      %2145 = vst.msk [vmem:[%s233 + $0xa0] sm:$0xff] %vm1324, %v2113
      %2146 = vst.msk [vmem:[%s233 + $0xa8] sm:$0xff] %vm1324, %v2114
      %2147 = vst.msk [vmem:[%s233 + $0xb0] sm:$0xff] %vm1324, %v2115
      %2148 = vst.msk [vmem:[%s233 + $0xb8] sm:$0xff] %vm1324, %v2116
      %2149 = vst.msk [vmem:[%s233 + $0xc0] sm:$0xff] %vm1324, %v2117
      %2150 = vst.msk [vmem:[%s233 + $0xc8] sm:$0xff] %vm1324, %v2118
      %2151 = vst.msk [vmem:[%s233 + $0xd0] sm:$0xff] %vm1324, %v2119
      %2152 = vst.msk [vmem:[%s233 + $0xd8] sm:$0xff] %vm1324, %v2120
      %2153 = vst.msk [vmem:[%s233 + $0xe0] sm:$0xff] %vm1324, %v2121
      %2154 = vst.msk [vmem:[%s233 + $0xe8] sm:$0xff] %vm1324, %v2122
      %2155 = vst.msk [vmem:[%s233 + $0xf0] sm:$0xff] %vm1324, %v2123
      %2156 = vst.msk [vmem:[%s233 + $0xf8] sm:$0xff] %vm1324, %v2124
      %p2157 = scmp.lt.s32.totalorder %s19, 1
      %s2158 = scalar_select %p2157, %s19, 1
      %p2159 = scmp.lt.s32.totalorder %s20, 0
      %s2160 = scalar_select %p2159, %s20, 0
      %s2161 = smul.addr %s2160, 32
      %s2162 = smul.addr %s2158, 32
      %s2163 = sadd.s32 %s2161, %s2162
      %s2164 = smul.addr %s2163, 8
      %s2165 = scalar_lea.vmem %s4, %s2164
      // Predicated region
      $region37: #{tpu_custom_call.1} parent=35 // pred_check
        %p2166 = pneg %p138
      $region38: #{tpu_custom_call.1} parent=35 // pred_check_branch
        %2168 = sbr.rel (%p2166) target = $region40
      $region39: #{tpu_custom_call.1} parent=35 // pred_region
        _
      $region40: #{tpu_custom_call.1} parent=35 // pred_fallthru
        _
    $region36: #{tpu_custom_call.1} parent=5 // pred_fallthru
      _
    %p2169 = scmp.le.s32.totalorder 2, %s10
    // Predicated region
    $region41: #{tpu_custom_call.1} parent=5 // pred_check
      %p2170 = pneg %p2169
    $region42: #{tpu_custom_call.1} parent=5 // pred_check_branch
      %2172 = sbr.rel (%p2170) target = $region44
    $region43: #{tpu_custom_call.1} parent=5 // pred_region
      %s2173 = ssub.s32 %s10, 2
      // Predicated region
      $region45: #{tpu_custom_call.1} parent=43 // pred_check
        %p2174 = pneg %p144
      $region46: #{tpu_custom_call.1} parent=43 // pred_check_branch
        %2176 = sbr.rel (%p2174) target = $region48
      $region47: #{tpu_custom_call.1} parent=43 // pred_region
        %p2177 = scmp.lt.s32.totalorder %s21, 1
        %s2178 = scalar_select %p2177, %s21, 1
        %p2179 = scmp.lt.s32.totalorder %s22, 0
        %s2180 = scalar_select %p2179, %s22, 0
        %s2181 = smul.addr %s2180, 32
        %s2182 = smul.addr %s2178, 32
        %s2183 = sadd.s32 %s2181, %s2182
        %s2184 = smul.addr %s2183, 8
        %s2185 = scalar_lea.vmem %s4, %s2184
      $region48: #{tpu_custom_call.1} parent=43 // pred_fallthru
        _
    $region44: #{tpu_custom_call.1} parent=5 // pred_fallthru
      _
  $region6: #{tpu_custom_call.1} parent=0 // loop_footer
    %s14 = sadd.s32 1, %s10
  $region7: #{tpu_custom_call.1} parent=0 // loop_footer_branch
    %9 = sbr.rel target = $region3
  $region8: #{tpu_custom_call.1} parent=0 // loop_exit
    _

</llo_original>
